<compile_context>
chip_gen: v5e
topology: v5e:2x2
jax: 0.10.0
libtpu: 0.0.40
codegen_flags: <defaults>
</compile_context>

<pallas_src>
import functools

import jax
import jax.numpy as jnp
from jax import lax
from jax.experimental import pallas as pl
from jax.experimental.pallas import tpu as pltpu


def _default_vmem_limit():
    """Generation-aware VMEM budget with headroom (128 MiB gens vs v7x 64 MiB)."""
    try:
        cap = int(pltpu.get_tpu_info().vmem_capacity_bytes)
    except Exception:
        cap = 64 * 1024 * 1024
    return max(32 * 1024 * 1024, min(int(cap * 3) // 4, 100 * 1024 * 1024))


_VMEM_LIMIT = _default_vmem_limit()


def _mosaic_params(dimension_semantics):
    return pltpu.CompilerParams(
        dimension_semantics=tuple(dimension_semantics),
        vmem_limit_bytes=_VMEM_LIMIT,
    )


def _pick_tile(dim, max_tile, align):
    """Largest tile <= max_tile that divides `dim` and is `align`-aligned, else full dim."""
    if dim <= max_tile:
        return dim
    t = (max_tile // align) * align
    while t >= align:
        if dim % t == 0:
            return t
        t -= align
    return dim


# ----------------------------------------------------------------------------
# RMSNorm + matmul (te.LayerNormLinear, RMSNorm, no bias)
# ----------------------------------------------------------------------------
def _rmsnorm_matmul_kernel(x_ref, g_ref, w_ref, o_ref, xn_ref, *, eps):
    # Normalize the row block once per M tile (j == 0), reuse for every N tile.
    @pl.when(pl.program_id(1) == 0)
    def _():
        x = x_ref[...].astype(jnp.float32)                       # (tm, E)
        ms = jnp.mean(x * x, axis=-1, keepdims=True)
        xn_ref[...] = (x * lax.rsqrt(ms + eps)
                       * g_ref[...].astype(jnp.float32)).astype(jnp.bfloat16)

    o_ref[...] = jnp.dot(xn_ref[...], w_ref[...],
                         preferred_element_type=jnp.float32).astype(o_ref.dtype)


def rmsnorm_matmul(x, gamma, w, eps, out_dtype=jnp.bfloat16,
                   tile_m_max=256, tile_n_max=512):
    M, E = x.shape
    N = w.shape[1]
    tm = _pick_tile(M, tile_m_max, 16)          # 16-aligned for bf16 sublane packing
    tn = _pick_tile(N, tile_n_max, 128)
    return pl.pallas_call(
        functools.partial(_rmsnorm_matmul_kernel, eps=eps),
        out_shape=jax.ShapeDtypeStruct((M, N), out_dtype),
        grid=(M // tm, N // tn),
        in_specs=[pl.BlockSpec((tm, E), lambda i, j: (i, 0)),
                  pl.BlockSpec((1, E), lambda i, j: (0, 0)),
                  pl.BlockSpec((E, tn), lambda i, j: (0, j))],
        out_specs=pl.BlockSpec((tm, tn), lambda i, j: (i, j)),
        scratch_shapes=[pltpu.VMEM((tm, E), jnp.bfloat16)],
        compiler_params=_mosaic_params(("parallel", "arbitrary")),
    )(x, gamma.reshape(1, E), w)


# ----------------------------------------------------------------------------
# RMSNorm + gate/up matmuls + SwiGLU (first half of te.LayerNormMLP)
# ----------------------------------------------------------------------------
def _rmsnorm_swiglu_kernel(x_ref, g_ref, wg_ref, wu_ref, o_ref, xn_ref, *, eps):
    @pl.when(pl.program_id(1) == 0)
    def _():
        x = x_ref[...].astype(jnp.float32)
        ms = jnp.mean(x * x, axis=-1, keepdims=True)
        xn_ref[...] = (x * lax.rsqrt(ms + eps)
                       * g_ref[...].astype(jnp.float32)).astype(jnp.bfloat16)

    xn = xn_ref[...]
    gate = jnp.dot(xn, wg_ref[...], preferred_element_type=jnp.float32)
    up = jnp.dot(xn, wu_ref[...], preferred_element_type=jnp.float32)
    o_ref[...] = (gate * jax.nn.sigmoid(gate) * up).astype(o_ref.dtype)


def rmsnorm_swiglu(x, gamma, w_gate, w_up, eps, tile_m_max=256, tile_n_max=512):
    M, E = x.shape
    N = w_gate.shape[1]
    tm = _pick_tile(M, tile_m_max, 16)
    tn = _pick_tile(N, tile_n_max, 128)
    return pl.pallas_call(
        functools.partial(_rmsnorm_swiglu_kernel, eps=eps),
        out_shape=jax.ShapeDtypeStruct((M, N), jnp.bfloat16),
        grid=(M // tm, N // tn),
        in_specs=[pl.BlockSpec((tm, E), lambda i, j: (i, 0)),
                  pl.BlockSpec((1, E), lambda i, j: (0, 0)),
                  pl.BlockSpec((E, tn), lambda i, j: (0, j)),
                  pl.BlockSpec((E, tn), lambda i, j: (0, j))],
        out_specs=pl.BlockSpec((tm, tn), lambda i, j: (i, j)),
        scratch_shapes=[pltpu.VMEM((tm, E), jnp.bfloat16)],
        compiler_params=_mosaic_params(("parallel", "arbitrary")),
    )(x, gamma.reshape(1, E), w_gate, w_up)


# ----------------------------------------------------------------------------
# K-tiled matmul + fused residual add (MLP down projection)
# ----------------------------------------------------------------------------
def _matmul_residual_kernel(x_ref, w_ref, r_ref, o_ref, acc_ref):
    @pl.when(pl.program_id(2) == 0)
    def _():
        acc_ref[...] = r_ref[...].astype(jnp.float32)
    acc_ref[...] += jnp.dot(x_ref[...], w_ref[...],
                            preferred_element_type=jnp.float32)

    @pl.when(pl.program_id(2) == pl.num_programs(2) - 1)
    def _():
        o_ref[...] = acc_ref[...].astype(o_ref.dtype)


def matmul_residual(x, w, residual, tile_m_max=256, tile_n_max=512, tile_k_max=1024):
    M, K = x.shape
    N = w.shape[1]
    tm = _pick_tile(M, tile_m_max, 16)
    tn = _pick_tile(N, tile_n_max, 128)
    tk = _pick_tile(K, tile_k_max, 128)     # K-tiled: weight blocks stream (v7x VMEM)
    return pl.pallas_call(
        _matmul_residual_kernel,
        out_shape=jax.ShapeDtypeStruct((M, N), residual.dtype),
        grid=(M // tm, N // tn, K // tk),
        in_specs=[pl.BlockSpec((tm, tk), lambda i, j, k: (i, k)),
                  pl.BlockSpec((tk, tn), lambda i, j, k: (k, j)),
                  pl.BlockSpec((tm, tn), lambda i, j, k: (i, j))],
        out_specs=pl.BlockSpec((tm, tn), lambda i, j, k: (i, j)),
        scratch_shapes=[pltpu.VMEM((tm, tn), jnp.float32)],
        compiler_params=_mosaic_params(("parallel", "parallel", "arbitrary")),
    )(x, w, residual)


# ----------------------------------------------------------------------------
# Attention: grid over (batch, KV-group); RoPE + causal softmax, bf16 MXU ops
# ----------------------------------------------------------------------------
def _attn_kernel(qkv_ref, cos_ref, sinf_ref, o_ref, *, group, D, scale):
    """One (batch, kv-group) step.

    qkv_ref block: (1, 1, T, (group+2)*D)  -- [q_0..q_{group-1} | k | v] columns.
    o_ref   block: (1, 1, T, group*D)      -- per-head slices written directly.
    """
    qkv = qkv_ref[0, 0]                               # (T, (group+2)*D) bf16
    cos = cos_ref[...]                                # (T, D) f32
    sinf = sinf_ref[...]                              # (T, D) f32, sign-folded
    T = qkv.shape[0]
    d_half = D // 2

    def rope(x):                                      # x: (T, D) f32
        # rotate_half(x)*sin == roll(x, D/2)*sin_fold  (sign folded into the table)
        if D % 128 == 0:
            rot = pltpu.roll(x, shift=d_half, axis=1)     # XLU lane rotate (free slot)
        else:
            rot = jnp.concatenate([x[:, d_half:], x[:, :d_half]], axis=-1)
        return x * cos + rot * sinf

    row = lax.broadcasted_iota(jnp.int32, (T, T), 0)
    col = lax.broadcasted_iota(jnp.int32, (T, T), 1)
    causal = col <= row

    # RoPE the group's single K head once; V stays bf16 and MXU-ready.
    k = rope(qkv[:, group * D:(group + 1) * D].astype(jnp.float32)).astype(jnp.bfloat16)
    v = qkv[:, (group + 1) * D:(group + 2) * D]

    for hq in range(group):
        q = rope(qkv[:, hq * D:(hq + 1) * D].astype(jnp.float32))
        q = (q * scale).astype(jnp.bfloat16)          # fold 1/sqrt(D) into q (T,D)
        # Contract q dim 1 with k dim 1: no explicit K transpose/relayout.
        s = lax.dot_general(q, k, (((1,), (1,)), ((), ())),
                            preferred_element_type=jnp.float32)        # (T, T)
        s = jnp.where(causal, s, -1e30)
        m = jnp.max(s, axis=-1, keepdims=True)
        p = jnp.exp(s - m)
        l = jnp.sum(p, axis=-1, keepdims=True)
        out = jnp.dot(p.astype(jnp.bfloat16), v,
                      preferred_element_type=jnp.float32)               # (T, D)
        out = out * pl.reciprocal(l, approx=True)     # normalize (T,D), not (T,T)
        o_ref[0, 0, :, hq * D:(hq + 1) * D] = out.astype(o_ref.dtype)


def attention(qkv_t, cos, sin_fold, *, group, D):
    B, Hkv, T, C = qkv_t.shape
    scale = 1.0 / (D ** 0.5)
    return pl.pallas_call(
        functools.partial(_attn_kernel, group=group, D=D, scale=scale),
        out_shape=jax.ShapeDtypeStruct((B, Hkv, T, group * D), jnp.bfloat16),
        grid=(B, Hkv),
        in_specs=[pl.BlockSpec((1, 1, T, C), lambda b, g: (b, g, 0, 0)),
                  pl.BlockSpec((T, D), lambda b, g: (0, 0)),
                  pl.BlockSpec((T, D), lambda b, g: (0, 0))],
        out_specs=pl.BlockSpec((1, 1, T, group * D), lambda b, g: (b, g, 0, 0)),
        compiler_params=_mosaic_params(("parallel", "parallel")),
    )(qkv_t, cos, sin_fold)


# ----------------------------------------------------------------------------
# Out projection + residual: reduces over KV-group blocks of the 4D context
# (consumes attention output directly -- no transpose back to (B*T, H*D)).
# ----------------------------------------------------------------------------
def _outproj_residual_kernel(ctx_ref, w_ref, r_ref, o_ref, acc_ref):
    @pl.when(pl.program_id(2) == 0)
    def _():
        acc_ref[...] = r_ref[...].astype(jnp.float32)
    acc_ref[...] += jnp.dot(ctx_ref[0, 0], w_ref[...],
                            preferred_element_type=jnp.float32)

    @pl.when(pl.program_id(2) == pl.num_programs(2) - 1)
    def _():
        o_ref[...] = acc_ref[...].astype(o_ref.dtype)


def outproj_residual(ctx, w, residual, tile_n_max=512):
    B, Hkv, T, GD = ctx.shape          # GD = group * D
    K, N = w.shape                     # K = H * D (head-major rows), N = d_embd
    M = residual.shape[0]              # B * T
    assert K == Hkv * GD and M == B * T and T % 8 == 0
    tn = _pick_tile(N, tile_n_max, 128)
    return pl.pallas_call(
        _outproj_residual_kernel,
        out_shape=jax.ShapeDtypeStruct((M, N), residual.dtype),
        grid=(B, N // tn, Hkv),
        in_specs=[pl.BlockSpec((1, 1, T, GD), lambda b, j, g: (b, g, 0, 0)),
                  pl.BlockSpec((GD, tn), lambda b, j, g: (g, j)),
                  pl.BlockSpec((T, tn), lambda b, j, g: (b, j))],
        out_specs=pl.BlockSpec((T, tn), lambda b, j, g: (b, j)),
        scratch_shapes=[pltpu.VMEM((T, tn), jnp.float32)],
        compiler_params=_mosaic_params(("parallel", "parallel", "arbitrary")),
    )(ctx, w, residual)


# ----------------------------------------------------------------------------
# Model glue (parameter init, RoPE tables, residual-stream plumbing)
# ----------------------------------------------------------------------------
def rope_cos_sin(T, head_dim):
    # te.attention.RotaryPositionEmbedding: emb = cat([freqs, freqs], -1); the
    # buffer is registered as bf16, so round-trip through bf16 to match.
    inv_freq = 1.0 / (10000.0 ** (jnp.arange(0, head_dim, 2, dtype=jnp.float32)
                                  / head_dim))
    t = jnp.arange(T, dtype=jnp.float32)
    freqs = jnp.outer(t, inv_freq)                      # (T, D/2)
    emb = jnp.concatenate([freqs, freqs], axis=-1)      # (T, D)
    emb = emb.astype(jnp.bfloat16).astype(jnp.float32)
    d_half = head_dim // 2
    # Sign-folded sin so rotate_half == roll(x, D/2) * sin_fold inside the kernel.
    sign = jnp.concatenate([-jnp.ones((d_half,), jnp.float32),
                            jnp.ones((d_half,), jnp.float32)])
    return jnp.cos(emb), jnp.sin(emb) * sign


def init_params(key, *, vocab_size, d_embd, d_hid, n_heads, n_kv_heads, n_layers):
    # TE: num_gqa_groups (= number of KV heads) = n_heads // n_kv_heads, exactly
    # as passed by Fp8LLaMABlock's constructor.
    n_kv = n_heads // n_kv_heads
    D = d_embd // n_heads
    # Fused QKV weight columns are laid out KV-group-major:
    #   for each group g: [q heads g*group .. (g+1)*group-1 | k_g | v_g].
    # (Random init, so the layout choice does not change semantics; w_o rows
    #  stay natural head-major and line up with the 4D context blocks.)
    qkv_cols = (n_heads + 2 * n_kv) * D

    def nrm(k, shape, scale=0.02, dtype=jnp.bfloat16):
        return (scale * jax.random.normal(k, shape, jnp.float32)).astype(dtype)

    keys = jax.random.split(key, 2 + n_layers)
    params = {
        "tok_embd": nrm(keys[0], (vocab_size, d_embd), dtype=jnp.float32),
        "lnf_g": jnp.ones((d_embd,), jnp.float32),
        "w_head": nrm(keys[1], (d_embd, vocab_size)),           # bf16 weights in HBM
        "layers": [],
    }
    for l in range(n_layers):
        lk = jax.random.split(keys[2 + l], 5)
        params["layers"].append({
            "ln1_g": jnp.ones((d_embd,), jnp.float32),
            "w_qkv": nrm(lk[0], (d_embd, qkv_cols)),
            "w_o": nrm(lk[1], (n_heads * D, d_embd)),
            "ln2_g": jnp.ones((d_embd,), jnp.float32),
            "w_gate": nrm(lk[2], (d_embd, d_hid)),
            "w_up": nrm(lk[3], (d_embd, d_hid)),
            "w_down": nrm(lk[4], (d_hid, d_embd)),
        })
    return params


def fp8_llama_forward(params, idx_BT, *, n_heads, n_kv_heads, norm_eps,
                      is_first_microbatch=None):
    # is_first_microbatch only toggles TE's fp8 weight cache -> no numeric effect.
    del is_first_microbatch
    B, T = idx_BT.shape
    E = params["tok_embd"].shape[1]
    H = n_heads
    Hkv = n_heads // n_kv_heads          # TE num_gqa_groups == number of KV heads
    group = H // Hkv                     # query heads per KV head
    D = E // H
    C = (group + 2) * D                  # per-KV-group fused QKV columns
    cos, sin_fold = rope_cos_sin(T, D)

    # Residual stream: bf16 (B*T, E) slab, E on lanes (residual adds accumulate
    # in f32 inside the kernels before the bf16 store).
    x = jnp.take(params["tok_embd"], idx_BT, axis=0).reshape(B * T, E)
    x = x.astype(jnp.bfloat16)

    for layer in params["layers"]:
        # --- attention block -------------------------------------------------
        qkv = rmsnorm_matmul(x, layer["ln1_g"], layer["w_qkv"], norm_eps)  # bf16
        qkv = qkv.reshape(B, T, Hkv, C).transpose(0, 2, 1, 3)   # (B, Hkv, T, C)
        ctx = attention(qkv, cos, sin_fold, group=group, D=D)   # (B, Hkv, T, gD)
        x = outproj_residual(ctx, layer["w_o"], x)              # (B*T, E) bf16

        # --- MLP block -------------------------------------------------------
        act = rmsnorm_swiglu(x, layer["ln2_g"], layer["w_gate"], layer["w_up"],
                             norm_eps)                          # bf16
        x = matmul_residual(act, layer["w_down"], x)            # (B*T, E) bf16

    logits = rmsnorm_matmul(x, params["lnf_g"], params["w_head"], norm_eps,
                            out_dtype=jnp.float32)
    return logits.reshape(B, T, -1)


# ----------------------------------------------------------------------------
if __name__ == "__main__":
    # Small config consistent with the module's constructor arguments.
    vocab_size = 256
    d_embd = 64
    d_hid = 128
    n_layers = 2
    n_heads = 4
    n_kv_heads = 2      # -> num_gqa_groups = n_heads // n_kv_heads = 2 KV heads
    norm_eps = 1e-5
    B, T = 2, 8

    root = jax.random.PRNGKey(0)
    k_params, k_idx = jax.random.split(root)

    params = init_params(k_params, vocab_size=vocab_size, d_embd=d_embd,
                         d_hid=d_hid, n_heads=n_heads, n_kv_heads=n_kv_heads,
                         n_layers=n_layers)
    idx_BT = jax.random.randint(k_idx, (B, T), 0, vocab_size, dtype=jnp.int32)

    fwd = jax.jit(functools.partial(
        fp8_llama_forward, n_heads=n_heads, n_kv_heads=n_kv_heads,
        norm_eps=norm_eps, is_first_microbatch=True))

    logits_BTV = fwd(params, idx_BT)
    jax.block_until_ready(logits_BTV)

    assert logits_BTV.shape == (B, T, vocab_size)
    assert logits_BTV.dtype == jnp.float32
    assert bool(jnp.all(jnp.isfinite(logits_BTV)))
    print("KERNEL_OK")
</pallas_src>

<mosaic_0001>
module attributes {stable_mosaic.version = 11 : i64} {
  func.func @_rmsnorm_matmul_kernel(%arg0: i32, %arg1: i32, %arg2: memref<16x64xbf16, #tpu.memory_space<vmem>>, %arg3: memref<1x64xf32, #tpu.memory_space<vmem>>, %arg4: memref<64x128xbf16, #tpu.memory_space<vmem>>, %arg5: memref<16x128xbf16, #tpu.memory_space<vmem>>, %arg6: memref<16x64xbf16, #tpu.memory_space<vmem>>) attributes {dimension_semantics = [#tpu.dimension_semantics<parallel>, #tpu.dimension_semantics<arbitrary>], iteration_bounds = array<i64: 1, 1>, scalar_prefetch = 0 : i64, scratch_operands = 1 : i64, tpu.core_type = #tpu.core_type<tc>, window_params = [{transform_indices = @transform_0, window_bounds = array<i64: 16, 64>}, {pipeline_mode = #tpu.pipeline_mode<synchronous>, transform_indices = @transform_1, window_bounds = array<i64: 1, 64>}, {transform_indices = @transform_2, window_bounds = array<i64: 64, 128>}, {transform_indices = @transform_3, window_bounds = array<i64: 16, 128>}]} {
    %c0_i32 = arith.constant 0 : i32
    %0 = arith.cmpi eq, %arg1, %c0_i32 : i32
    %1 = arith.extui %0 : i1 to i32
    %c0_i32_0 = arith.constant 0 : i32
    %2 = arith.cmpi ne, %1, %c0_i32_0 : i32
    scf.if %2 {
      %c0_6 = arith.constant 0 : index
      %c0_7 = arith.constant 0 : index
      %8 = vector.load %arg2[%c0_6, %c0_7] : memref<16x64xbf16, #tpu.memory_space<vmem>>, vector<16x64xbf16>
      %9 = arith.extf %8 : vector<16x64xbf16> to vector<16x64xf32>
      %10 = arith.mulf %9, %9 : vector<16x64xf32>
      %cst_8 = arith.constant dense<0.000000e+00> : vector<16xf32>
      %11 = vector.multi_reduction <add>, %10, %cst_8 [1] : vector<16x64xf32> to vector<16xf32>
      %12 = vector.shape_cast %11 : vector<16xf32> to vector<16x1xf32>
      %cst_9 = arith.constant 6.400000e+01 : f32
      %13 = vector.broadcast %cst_9 : f32 to vector<16x1xf32>
      %14 = arith.divf %12, %13 : vector<16x1xf32>
      %cst_10 = arith.constant 9.99999974E-6 : f32
      %15 = vector.broadcast %cst_10 : f32 to vector<16x1xf32>
      %16 = arith.addf %14, %15 : vector<16x1xf32>
      %17 = math.rsqrt %16 : vector<16x1xf32>
      %18 = vector.broadcast %17 : vector<16x1xf32> to vector<16x64xf32>
      %19 = arith.mulf %9, %18 : vector<16x64xf32>
      %c0_11 = arith.constant 0 : index
      %c0_12 = arith.constant 0 : index
      %20 = vector.load %arg3[%c0_11, %c0_12] : memref<1x64xf32, #tpu.memory_space<vmem>>, vector<1x64xf32>
      %21 = vector.broadcast %20 : vector<1x64xf32> to vector<16x64xf32>
      %22 = arith.mulf %19, %21 : vector<16x64xf32>
      %23 = arith.truncf %22 : vector<16x64xf32> to vector<16x64xbf16>
      %c0_13 = arith.constant 0 : index
      %c0_14 = arith.constant 0 : index
      %24 = vector.load %arg6[%c0_13, %c0_14] : memref<16x64xbf16, #tpu.memory_space<vmem>>, vector<16x64xbf16>
      tpu.vector_store %arg6[%c0_13, %c0_14], %23 {strides = array<i32>} : memref<16x64xbf16, #tpu.memory_space<vmem>>, vector<16x64xbf16>,
    } else {
    }
    %c0 = arith.constant 0 : index
    %c0_1 = arith.constant 0 : index
    %3 = vector.load %arg6[%c0, %c0_1] : memref<16x64xbf16, #tpu.memory_space<vmem>>, vector<16x64xbf16>
    %c0_2 = arith.constant 0 : index
    %c0_3 = arith.constant 0 : index
    %4 = vector.load %arg4[%c0_2, %c0_3] : memref<64x128xbf16, #tpu.memory_space<vmem>>, vector<64x128xbf16>
    %cst = arith.constant dense<0.000000e+00> : vector<16x128xf32>
    %5 = tpu.matmul %3, %4, %cst {dimension_numbers = #tpu.dot_dimension_numbers<[1], [0], [0], [1], [0, 0, 1, 1], [], []>} : vector<16x64xbf16>, vector<64x128xbf16>, vector<16x128xf32> -> vector<16x128xf32>
    %6 = arith.truncf %5 : vector<16x128xf32> to vector<16x128xbf16>
    %c0_4 = arith.constant 0 : index
    %c0_5 = arith.constant 0 : index
    %7 = vector.load %arg5[%c0_4, %c0_5] : memref<16x128xbf16, #tpu.memory_space<vmem>>, vector<16x128xbf16>
    tpu.vector_store %arg5[%c0_4, %c0_5], %6 {strides = array<i32>} : memref<16x128xbf16, #tpu.memory_space<vmem>>, vector<16x128xbf16>,
    return
  }
  func.func @transform_0(%arg0: i32, %arg1: i32) -> (i32, i32) {
    %c0_i32 = arith.constant 0 : i32
    %c0_i32_0 = arith.constant 0 : i32
    return %arg0, %c0_i32 : i32, i32
  }
  func.func @transform_1(%arg0: i32, %arg1: i32) -> (i32, i32) {
    %c0_i32 = arith.constant 0 : i32
    %c0_i32_0 = arith.constant 0 : i32
    %c0_i32_1 = arith.constant 0 : i32
    return %c0_i32, %c0_i32_0 : i32, i32
  }
  func.func @transform_2(%arg0: i32, %arg1: i32) -> (i32, i32) {
    %c0_i32 = arith.constant 0 : i32
    %c0_i32_0 = arith.constant 0 : i32
    return %c0_i32, %arg1 : i32, i32
  }
  func.func @transform_3(%arg0: i32, %arg1: i32) -> (i32, i32) {
    %c0_i32 = arith.constant 0 : i32
    return %arg0, %arg1 : i32, i32
  }
}

module attributes {stable_mosaic.version = 11 : i64} {
  func.func @_attn_kernel(%arg0: i32, %arg1: i32, %arg2: memref<1x1x8x64xbf16, #tpu.memory_space<vmem>>, %arg3: memref<8x16xf32, #tpu.memory_space<vmem>>, %arg4: memref<8x16xf32, #tpu.memory_space<vmem>>, %arg5: memref<1x1x8x32xbf16, #tpu.memory_space<vmem>>) attributes {dimension_semantics = [#tpu.dimension_semantics<parallel>, #tpu.dimension_semantics<parallel>], iteration_bounds = array<i64: 2, 2>, scalar_prefetch = 0 : i64, scratch_operands = 0 : i64, tpu.core_type = #tpu.core_type<tc>, window_params = [{transform_indices = @transform_0, window_bounds = array<i64: 1, 1, 8, 64>}, {pipeline_mode = #tpu.pipeline_mode<synchronous>, transform_indices = @transform_1, window_bounds = array<i64: 8, 16>}, {pipeline_mode = #tpu.pipeline_mode<synchronous>, transform_indices = @transform_2, window_bounds = array<i64: 8, 16>}, {transform_indices = @transform_3, window_bounds = array<i64: 1, 1, 8, 32>}]} {
    %c0 = arith.constant 0 : index
    %c0_0 = arith.constant 0 : index
    %c0_1 = arith.constant 0 : index
    %c0_2 = arith.constant 0 : index
    %0 = vector.load %arg2[%c0, %c0_0, %c0_1, %c0_2] : memref<1x1x8x64xbf16, #tpu.memory_space<vmem>>, vector<1x1x8x64xbf16>
    %1 = vector.shape_cast %0 : vector<1x1x8x64xbf16> to vector<8x64xbf16>
    %c0_3 = arith.constant 0 : index
    %c0_4 = arith.constant 0 : index
    %2 = vector.load %arg3[%c0_3, %c0_4] : memref<8x16xf32, #tpu.memory_space<vmem>>, vector<8x16xf32>
    %c0_5 = arith.constant 0 : index
    %c0_6 = arith.constant 0 : index
    %3 = vector.load %arg4[%c0_5, %c0_6] : memref<8x16xf32, #tpu.memory_space<vmem>>, vector<8x16xf32>
    %4 = tpu.iota {dimensions = array<i32: 0>} : vector<8x8xi32>
    %5 = tpu.iota {dimensions = array<i32: 1>} : vector<8x8xi32>
    %6 = arith.cmpi sle, %5, %4 : vector<8x8xi32>
    %7 = vector.extract_strided_slice %1 {offsets = [0, 32], sizes = [8, 16], strides = [1, 1]} : vector<8x64xbf16> to vector<8x16xbf16>
    %8 = arith.extf %7 : vector<8x16xbf16> to vector<8x16xf32>
    %9 = vector.extract_strided_slice %8 {offsets = [0, 8], sizes = [8, 8], strides = [1, 1]} : vector<8x16xf32> to vector<8x8xf32>
    %10 = vector.extract_strided_slice %8 {offsets = [0, 0], sizes = [8, 8], strides = [1, 1]} : vector<8x16xf32> to vector<8x8xf32>
    %11 = tpu.concatenate %9, %10 in 1 : vector<8x8xf32>, vector<8x8xf32> -> vector<8x16xf32>
    %12 = arith.mulf %8, %2 : vector<8x16xf32>
    %13 = arith.mulf %11, %3 : vector<8x16xf32>
    %14 = arith.addf %12, %13 : vector<8x16xf32>
    %15 = arith.truncf %14 : vector<8x16xf32> to vector<8x16xbf16>
    %16 = vector.extract_strided_slice %1 {offsets = [0, 48], sizes = [8, 16], strides = [1, 1]} : vector<8x64xbf16> to vector<8x16xbf16>
    %17 = vector.extract_strided_slice %1 {offsets = [0, 0], sizes = [8, 16], strides = [1, 1]} : vector<8x64xbf16> to vector<8x16xbf16>
    %18 = arith.extf %17 : vector<8x16xbf16> to vector<8x16xf32>
    %19 = vector.extract_strided_slice %18 {offsets = [0, 8], sizes = [8, 8], strides = [1, 1]} : vector<8x16xf32> to vector<8x8xf32>
    %20 = vector.extract_strided_slice %18 {offsets = [0, 0], sizes = [8, 8], strides = [1, 1]} : vector<8x16xf32> to vector<8x8xf32>
    %21 = tpu.concatenate %19, %20 in 1 : vector<8x8xf32>, vector<8x8xf32> -> vector<8x16xf32>
    %22 = arith.mulf %18, %2 : vector<8x16xf32>
    %23 = arith.mulf %21, %3 : vector<8x16xf32>
    %24 = arith.addf %22, %23 : vector<8x16xf32>
    %cst = arith.constant 2.500000e-01 : f32
    %25 = vector.broadcast %cst : f32 to vector<8x16xf32>
    %26 = arith.mulf %24, %25 : vector<8x16xf32>
    %27 = arith.truncf %26 : vector<8x16xf32> to vector<8x16xbf16>
    %cst_7 = arith.constant dense<0.000000e+00> : vector<8x8xf32>
    %28 = tpu.matmul %27, %15, %cst_7 {dimension_numbers = #tpu.dot_dimension_numbers<[1], [1], [0], [0], [0, 0, 1, 0], [], []>} : vector<8x16xbf16>, vector<8x16xbf16>, vector<8x8xf32> -> vector<8x8xf32>
    %cst_8 = arith.constant -1.000000e+30 : f32
    %29 = vector.broadcast %cst_8 : f32 to vector<8x8xf32>
    %30 = arith.select %6, %28, %29 : vector<8x8xi1>, vector<8x8xf32>
    %cst_9 = arith.constant dense<0xFF800000> : vector<8xf32>
    %31 = vector.multi_reduction <maximumf>, %30, %cst_9 [1] : vector<8x8xf32> to vector<8xf32>
    %32 = vector.shape_cast %31 : vector<8xf32> to vector<8x1xf32>
    %33 = vector.broadcast %32 : vector<8x1xf32> to vector<8x8xf32>
    %34 = arith.subf %30, %33 : vector<8x8xf32>
    %35 = math.exp %34 : vector<8x8xf32>
    %cst_10 = arith.constant dense<0.000000e+00> : vector<8xf32>
    %36 = vector.multi_reduction <add>, %35, %cst_10 [1] : vector<8x8xf32> to vector<8xf32>
    %37 = vector.shape_cast %36 : vector<8xf32> to vector<8x1xf32>
    %38 = arith.truncf %35 : vector<8x8xf32> to vector<8x8xbf16>
    %cst_11 = arith.constant dense<0.000000e+00> : vector<8x16xf32>
    %39 = tpu.matmul %38, %16, %cst_11 {dimension_numbers = #tpu.dot_dimension_numbers<[1], [0], [0], [1], [0, 0, 1, 1], [], []>} : vector<8x8xbf16>, vector<8x16xbf16>, vector<8x16xf32> -> vector<8x16xf32>
    %40 = tpu.reciprocal %37 {approx = true} : vector<8x1xf32> -> vector<8x1xf32>
    %41 = vector.broadcast %40 : vector<8x1xf32> to vector<8x16xf32>
    %42 = arith.mulf %39, %41 : vector<8x16xf32>
    %43 = arith.truncf %42 : vector<8x16xf32> to vector<8x16xbf16>
    %c0_12 = arith.constant 0 : index
    %c0_13 = arith.constant 0 : index
    %c0_14 = arith.constant 0 : index
    %c0_15 = arith.constant 0 : index
    %44 = vector.load %arg5[%c0_12, %c0_13, %c0_14, %c0_15] : memref<1x1x8x32xbf16, #tpu.memory_space<vmem>>, vector<1x1x8x16xbf16>
    %45 = vector.shape_cast %44 : vector<1x1x8x16xbf16> to vector<8x16xbf16>
    %46 = vector.shape_cast %43 : vector<8x16xbf16> to vector<1x1x8x16xbf16>
    tpu.vector_store %arg5[%c0_12, %c0_13, %c0_14, %c0_15], %46 {strides = array<i32>} : memref<1x1x8x32xbf16, #tpu.memory_space<vmem>>, vector<1x1x8x16xbf16>,
    %47 = vector.extract_strided_slice %1 {offsets = [0, 16], sizes = [8, 16], strides = [1, 1]} : vector<8x64xbf16> to vector<8x16xbf16>
    %48 = arith.extf %47 : vector<8x16xbf16> to vector<8x16xf32>
    %49 = vector.extract_strided_slice %48 {offsets = [0, 8], sizes = [8, 8], strides = [1, 1]} : vector<8x16xf32> to vector<8x8xf32>
    %50 = vector.extract_strided_slice %48 {offsets = [0, 0], sizes = [8, 8], strides = [1, 1]} : vector<8x16xf32> to vector<8x8xf32>
    %51 = tpu.concatenate %49, %50 in 1 : vector<8x8xf32>, vector<8x8xf32> -> vector<8x16xf32>
    %52 = arith.mulf %48, %2 : vector<8x16xf32>
    %53 = arith.mulf %51, %3 : vector<8x16xf32>
    %54 = arith.addf %52, %53 : vector<8x16xf32>
    %cst_16 = arith.constant 2.500000e-01 : f32
    %55 = vector.broadcast %cst_16 : f32 to vector<8x16xf32>
    %56 = arith.mulf %54, %55 : vector<8x16xf32>
    %57 = arith.truncf %56 : vector<8x16xf32> to vector<8x16xbf16>
    %cst_17 = arith.constant dense<0.000000e+00> : vector<8x8xf32>
    %58 = tpu.matmul %57, %15, %cst_17 {dimension_numbers = #tpu.dot_dimension_numbers<[1], [1], [0], [0], [0, 0, 1, 0], [], []>} : vector<8x16xbf16>, vector<8x16xbf16>, vector<8x8xf32> -> vector<8x8xf32>
    %cst_18 = arith.constant -1.000000e+30 : f32
    %59 = vector.broadcast %cst_18 : f32 to vector<8x8xf32>
    %60 = arith.select %6, %58, %59 : vector<8x8xi1>, vector<8x8xf32>
    %cst_19 = arith.constant dense<0xFF800000> : vector<8xf32>
    %61 = vector.multi_reduction <maximumf>, %60, %cst_19 [1] : vector<8x8xf32> to vector<8xf32>
    %62 = vector.shape_cast %61 : vector<8xf32> to vector<8x1xf32>
    %63 = vector.broadcast %62 : vector<8x1xf32> to vector<8x8xf32>
    %64 = arith.subf %60, %63 : vector<8x8xf32>
    %65 = math.exp %64 : vector<8x8xf32>
    %cst_20 = arith.constant dense<0.000000e+00> : vector<8xf32>
    %66 = vector.multi_reduction <add>, %65, %cst_20 [1] : vector<8x8xf32> to vector<8xf32>
    %67 = vector.shape_cast %66 : vector<8xf32> to vector<8x1xf32>
    %68 = arith.truncf %65 : vector<8x8xf32> to vector<8x8xbf16>
    %cst_21 = arith.constant dense<0.000000e+00> : vector<8x16xf32>
    %69 = tpu.matmul %68, %16, %cst_21 {dimension_numbers = #tpu.dot_dimension_numbers<[1], [0], [0], [1], [0, 0, 1, 1], [], []>} : vector<8x8xbf16>, vector<8x16xbf16>, vector<8x16xf32> -> vector<8x16xf32>
    %70 = tpu.reciprocal %67 {approx = true} : vector<8x1xf32> -> vector<8x1xf32>
    %71 = vector.broadcast %70 : vector<8x1xf32> to vector<8x16xf32>
    %72 = arith.mulf %69, %71 : vector<8x16xf32>
    %73 = arith.truncf %72 : vector<8x16xf32> to vector<8x16xbf16>
    %c0_22 = arith.constant 0 : index
    %c0_23 = arith.constant 0 : index
    %c0_24 = arith.constant 0 : index
    %c16 = arith.constant 16 : index
    %74 = vector.load %arg5[%c0_22, %c0_23, %c0_24, %c16] : memref<1x1x8x32xbf16, #tpu.memory_space<vmem>>, vector<1x1x8x16xbf16>
    %75 = vector.shape_cast %74 : vector<1x1x8x16xbf16> to vector<8x16xbf16>
    %76 = vector.shape_cast %73 : vector<8x16xbf16> to vector<1x1x8x16xbf16>
    tpu.vector_store %arg5[%c0_22, %c0_23, %c0_24, %c16], %76 {strides = array<i32>} : memref<1x1x8x32xbf16, #tpu.memory_space<vmem>>, vector<1x1x8x16xbf16>,
    return
  }
  func.func @transform_0(%arg0: i32, %arg1: i32) -> (i32, i32, i32, i32) {
    %c0_i32 = arith.constant 0 : i32
    %c0_i32_0 = arith.constant 0 : i32
    %c0_i32_1 = arith.constant 0 : i32
    return %arg0, %arg1, %c0_i32, %c0_i32_0 : i32, i32, i32, i32
  }
  func.func @transform_1(%arg0: i32, %arg1: i32) -> (i32, i32) {
    %c0_i32 = arith.constant 0 : i32
    %c0_i32_0 = arith.constant 0 : i32
    %c0_i32_1 = arith.constant 0 : i32
    return %c0_i32, %c0_i32_0 : i32, i32
  }
  func.func @transform_2(%arg0: i32, %arg1: i32) -> (i32, i32) {
    %c0_i32 = arith.constant 0 : i32
    %c0_i32_0 = arith.constant 0 : i32
    %c0_i32_1 = arith.constant 0 : i32
    return %c0_i32, %c0_i32_0 : i32, i32
  }
  func.func @transform_3(%arg0: i32, %arg1: i32) -> (i32, i32, i32, i32) {
    %c0_i32 = arith.constant 0 : i32
    %c0_i32_0 = arith.constant 0 : i32
    %c0_i32_1 = arith.constant 0 : i32
    return %arg0, %arg1, %c0_i32, %c0_i32_0 : i32, i32, i32, i32
  }
}

module attributes {stable_mosaic.version = 11 : i64} {
  func.func @_outproj_residual_kernel(%arg0: i32, %arg1: i32, %arg2: i32, %arg3: memref<1x1x8x32xbf16, #tpu.memory_space<vmem>>, %arg4: memref<32x64xbf16, #tpu.memory_space<vmem>>, %arg5: memref<8x64xbf16, #tpu.memory_space<vmem>>, %arg6: memref<8x64xbf16, #tpu.memory_space<vmem>>, %arg7: memref<8x64xf32, #tpu.memory_space<vmem>>) attributes {dimension_semantics = [#tpu.dimension_semantics<parallel>, #tpu.dimension_semantics<parallel>, #tpu.dimension_semantics<arbitrary>], iteration_bounds = array<i64: 2, 1, 2>, scalar_prefetch = 0 : i64, scratch_operands = 1 : i64, tpu.core_type = #tpu.core_type<tc>, window_params = [{transform_indices = @transform_0, window_bounds = array<i64: 1, 1, 8, 32>}, {transform_indices = @transform_1, window_bounds = array<i64: 32, 64>}, {transform_indices = @transform_2, window_bounds = array<i64: 8, 64>}, {transform_indices = @transform_3, window_bounds = array<i64: 8, 64>}]} {
    %c0_i32 = arith.constant 0 : i32
    %0 = arith.cmpi eq, %arg2, %c0_i32 : i32
    %1 = arith.extui %0 : i1 to i32
    %c0_i32_0 = arith.constant 0 : i32
    %2 = arith.cmpi ne, %1, %c0_i32_0 : i32
    scf.if %2 {
      %c0_11 = arith.constant 0 : index
      %c0_12 = arith.constant 0 : index
      %13 = vector.load %arg5[%c0_11, %c0_12] : memref<8x64xbf16, #tpu.memory_space<vmem>>, vector<8x64xbf16>
      %14 = arith.extf %13 : vector<8x64xbf16> to vector<8x64xf32>
      %c0_13 = arith.constant 0 : index
      %c0_14 = arith.constant 0 : index
      %15 = vector.load %arg7[%c0_13, %c0_14] : memref<8x64xf32, #tpu.memory_space<vmem>>, vector<8x64xf32>
      tpu.vector_store %arg7[%c0_13, %c0_14], %14 {strides = array<i32>} : memref<8x64xf32, #tpu.memory_space<vmem>>, vector<8x64xf32>,
    } else {
    }
    %c0 = arith.constant 0 : index
    %c0_1 = arith.constant 0 : index
    %3 = vector.load %arg7[%c0, %c0_1] : memref<8x64xf32, #tpu.memory_space<vmem>>, vector<8x64xf32>
    %c0_2 = arith.constant 0 : index
    %c0_3 = arith.constant 0 : index
    %c0_4 = arith.constant 0 : index
    %c0_5 = arith.constant 0 : index
    %4 = vector.load %arg3[%c0_2, %c0_3, %c0_4, %c0_5] : memref<1x1x8x32xbf16, #tpu.memory_space<vmem>>, vector<1x1x8x32xbf16>
    %5 = vector.shape_cast %4 : vector<1x1x8x32xbf16> to vector<8x32xbf16>
    %c0_6 = arith.constant 0 : index
    %c0_7 = arith.constant 0 : index
    %6 = vector.load %arg4[%c0_6, %c0_7] : memref<32x64xbf16, #tpu.memory_space<vmem>>, vector<32x64xbf16>
    %cst = arith.constant dense<0.000000e+00> : vector<8x64xf32>
    %7 = tpu.matmul %5, %6, %cst {dimension_numbers = #tpu.dot_dimension_numbers<[1], [0], [0], [1], [0, 0, 1, 1], [], []>} : vector<8x32xbf16>, vector<32x64xbf16>, vector<8x64xf32> -> vector<8x64xf32>
    %8 = arith.addf %3, %7 : vector<8x64xf32>
    %c0_8 = arith.constant 0 : index
    %c0_9 = arith.constant 0 : index
    %9 = vector.load %arg7[%c0_8, %c0_9] : memref<8x64xf32, #tpu.memory_space<vmem>>, vector<8x64xf32>
    tpu.vector_store %arg7[%c0_8, %c0_9], %8 {strides = array<i32>} : memref<8x64xf32, #tpu.memory_space<vmem>>, vector<8x64xf32>,
    %c1_i32 = arith.constant 1 : i32
    %10 = arith.cmpi eq, %arg2, %c1_i32 : i32
    %11 = arith.extui %10 : i1 to i32
    %c0_i32_10 = arith.constant 0 : i32
    %12 = arith.cmpi ne, %11, %c0_i32_10 : i32
    scf.if %12 {
      %c0_11 = arith.constant 0 : index
      %c0_12 = arith.constant 0 : index
      %13 = vector.load %arg7[%c0_11, %c0_12] : memref<8x64xf32, #tpu.memory_space<vmem>>, vector<8x64xf32>
      %14 = arith.truncf %13 : vector<8x64xf32> to vector<8x64xbf16>
      %c0_13 = arith.constant 0 : index
      %c0_14 = arith.constant 0 : index
      %15 = vector.load %arg6[%c0_13, %c0_14] : memref<8x64xbf16, #tpu.memory_space<vmem>>, vector<8x64xbf16>
      tpu.vector_store %arg6[%c0_13, %c0_14], %14 {strides = array<i32>} : memref<8x64xbf16, #tpu.memory_space<vmem>>, vector<8x64xbf16>,
    } else {
    }
    return
  }
  func.func @transform_0(%arg0: i32, %arg1: i32, %arg2: i32) -> (i32, i32, i32, i32) {
    %c0_i32 = arith.constant 0 : i32
    %c0_i32_0 = arith.constant 0 : i32
    %c0_i32_1 = arith.constant 0 : i32
    return %arg0, %arg2, %c0_i32, %c0_i32_0 : i32, i32, i32, i32
  }
  func.func @transform_1(%arg0: i32, %arg1: i32, %arg2: i32) -> (i32, i32) {
    %c0_i32 = arith.constant 0 : i32
    return %arg2, %arg1 : i32, i32
  }
  func.func @transform_2(%arg0: i32, %arg1: i32, %arg2: i32) -> (i32, i32) {
    %c0_i32 = arith.constant 0 : i32
    return %arg0, %arg1 : i32, i32
  }
  func.func @transform_3(%arg0: i32, %arg1: i32, %arg2: i32) -> (i32, i32) {
    %c0_i32 = arith.constant 0 : i32
    return %arg0, %arg1 : i32, i32
  }
}

module attributes {stable_mosaic.version = 11 : i64} {
  func.func @_rmsnorm_swiglu_kernel(%arg0: i32, %arg1: i32, %arg2: memref<16x64xbf16, #tpu.memory_space<vmem>>, %arg3: memref<1x64xf32, #tpu.memory_space<vmem>>, %arg4: memref<64x128xbf16, #tpu.memory_space<vmem>>, %arg5: memref<64x128xbf16, #tpu.memory_space<vmem>>, %arg6: memref<16x128xbf16, #tpu.memory_space<vmem>>, %arg7: memref<16x64xbf16, #tpu.memory_space<vmem>>) attributes {dimension_semantics = [#tpu.dimension_semantics<parallel>, #tpu.dimension_semantics<arbitrary>], iteration_bounds = array<i64: 1, 1>, scalar_prefetch = 0 : i64, scratch_operands = 1 : i64, tpu.core_type = #tpu.core_type<tc>, window_params = [{transform_indices = @transform_0, window_bounds = array<i64: 16, 64>}, {pipeline_mode = #tpu.pipeline_mode<synchronous>, transform_indices = @transform_1, window_bounds = array<i64: 1, 64>}, {transform_indices = @transform_2, window_bounds = array<i64: 64, 128>}, {transform_indices = @transform_3, window_bounds = array<i64: 64, 128>}, {transform_indices = @transform_4, window_bounds = array<i64: 16, 128>}]} {
    %c0_i32 = arith.constant 0 : i32
    %0 = arith.cmpi eq, %arg1, %c0_i32 : i32
    %1 = arith.extui %0 : i1 to i32
    %c0_i32_0 = arith.constant 0 : i32
    %2 = arith.cmpi ne, %1, %c0_i32_0 : i32
    scf.if %2 {
      %c0_10 = arith.constant 0 : index
      %c0_11 = arith.constant 0 : index
      %17 = vector.load %arg2[%c0_10, %c0_11] : memref<16x64xbf16, #tpu.memory_space<vmem>>, vector<16x64xbf16>
      %18 = arith.extf %17 : vector<16x64xbf16> to vector<16x64xf32>
      %19 = arith.mulf %18, %18 : vector<16x64xf32>
      %cst_12 = arith.constant dense<0.000000e+00> : vector<16xf32>
      %20 = vector.multi_reduction <add>, %19, %cst_12 [1] : vector<16x64xf32> to vector<16xf32>
      %21 = vector.shape_cast %20 : vector<16xf32> to vector<16x1xf32>
      %cst_13 = arith.constant 6.400000e+01 : f32
      %22 = vector.broadcast %cst_13 : f32 to vector<16x1xf32>
      %23 = arith.divf %21, %22 : vector<16x1xf32>
      %cst_14 = arith.constant 9.99999974E-6 : f32
      %24 = vector.broadcast %cst_14 : f32 to vector<16x1xf32>
      %25 = arith.addf %23, %24 : vector<16x1xf32>
      %26 = math.rsqrt %25 : vector<16x1xf32>
      %27 = vector.broadcast %26 : vector<16x1xf32> to vector<16x64xf32>
      %28 = arith.mulf %18, %27 : vector<16x64xf32>
      %c0_15 = arith.constant 0 : index
      %c0_16 = arith.constant 0 : index
      %29 = vector.load %arg3[%c0_15, %c0_16] : memref<1x64xf32, #tpu.memory_space<vmem>>, vector<1x64xf32>
      %30 = vector.broadcast %29 : vector<1x64xf32> to vector<16x64xf32>
      %31 = arith.mulf %28, %30 : vector<16x64xf32>
      %32 = arith.truncf %31 : vector<16x64xf32> to vector<16x64xbf16>
      %c0_17 = arith.constant 0 : index
      %c0_18 = arith.constant 0 : index
      %33 = vector.load %arg7[%c0_17, %c0_18] : memref<16x64xbf16, #tpu.memory_space<vmem>>, vector<16x64xbf16>
      tpu.vector_store %arg7[%c0_17, %c0_18], %32 {strides = array<i32>} : memref<16x64xbf16, #tpu.memory_space<vmem>>, vector<16x64xbf16>,
    } else {
    }
    %c0 = arith.constant 0 : index
    %c0_1 = arith.constant 0 : index
    %3 = vector.load %arg7[%c0, %c0_1] : memref<16x64xbf16, #tpu.memory_space<vmem>>, vector<16x64xbf16>
    %c0_2 = arith.constant 0 : index
    %c0_3 = arith.constant 0 : index
    %4 = vector.load %arg4[%c0_2, %c0_3] : memref<64x128xbf16, #tpu.memory_space<vmem>>, vector<64x128xbf16>
    %cst = arith.constant dense<0.000000e+00> : vector<16x128xf32>
    %5 = tpu.matmul %3, %4, %cst {dimension_numbers = #tpu.dot_dimension_numbers<[1], [0], [0], [1], [0, 0, 1, 1], [], []>} : vector<16x64xbf16>, vector<64x128xbf16>, vector<16x128xf32> -> vector<16x128xf32>
    %c0_4 = arith.constant 0 : index
    %c0_5 = arith.constant 0 : index
    %6 = vector.load %arg5[%c0_4, %c0_5] : memref<64x128xbf16, #tpu.memory_space<vmem>>, vector<64x128xbf16>
    %cst_6 = arith.constant dense<0.000000e+00> : vector<16x128xf32>
    %7 = tpu.matmul %3, %6, %cst_6 {dimension_numbers = #tpu.dot_dimension_numbers<[1], [0], [0], [1], [0, 0, 1, 1], [], []>} : vector<16x64xbf16>, vector<64x128xbf16>, vector<16x128xf32> -> vector<16x128xf32>
    %8 = arith.negf %5 : vector<16x128xf32>
    %9 = math.exp %8 : vector<16x128xf32>
    %cst_7 = arith.constant 1.000000e+00 : f32
    %10 = vector.broadcast %cst_7 : f32 to vector<16x128xf32>
    %11 = arith.addf %10, %9 : vector<16x128xf32>
    %12 = arith.divf %10, %11 : vector<16x128xf32>
    %13 = arith.mulf %5, %12 : vector<16x128xf32>
    %14 = arith.mulf %13, %7 : vector<16x128xf32>
    %15 = arith.truncf %14 : vector<16x128xf32> to vector<16x128xbf16>
    %c0_8 = arith.constant 0 : index
    %c0_9 = arith.constant 0 : index
    %16 = vector.load %arg6[%c0_8, %c0_9] : memref<16x128xbf16, #tpu.memory_space<vmem>>, vector<16x128xbf16>
    tpu.vector_store %arg6[%c0_8, %c0_9], %15 {strides = array<i32>} : memref<16x128xbf16, #tpu.memory_space<vmem>>, vector<16x128xbf16>,
    return
  }
  func.func @transform_0(%arg0: i32, %arg1: i32) -> (i32, i32) {
    %c0_i32 = arith.constant 0 : i32
    %c0_i32_0 = arith.constant 0 : i32
    return %arg0, %c0_i32 : i32, i32
  }
  func.func @transform_1(%arg0: i32, %arg1: i32) -> (i32, i32) {
    %c0_i32 = arith.constant 0 : i32
    %c0_i32_0 = arith.constant 0 : i32
    %c0_i32_1 = arith.constant 0 : i32
    return %c0_i32, %c0_i32_0 : i32, i32
  }
  func.func @transform_2(%arg0: i32, %arg1: i32) -> (i32, i32) {
    %c0_i32 = arith.constant 0 : i32
    %c0_i32_0 = arith.constant 0 : i32
    return %c0_i32, %arg1 : i32, i32
  }
  func.func @transform_3(%arg0: i32, %arg1: i32) -> (i32, i32) {
    %c0_i32 = arith.constant 0 : i32
    %c0_i32_0 = arith.constant 0 : i32
    return %c0_i32, %arg1 : i32, i32
  }
  func.func @transform_4(%arg0: i32, %arg1: i32) -> (i32, i32) {
    %c0_i32 = arith.constant 0 : i32
    return %arg0, %arg1 : i32, i32
  }
}

module attributes {stable_mosaic.version = 11 : i64} {
  func.func @_matmul_residual_kernel(%arg0: i32, %arg1: i32, %arg2: i32, %arg3: memref<16x128xbf16, #tpu.memory_space<vmem>>, %arg4: memref<128x64xbf16, #tpu.memory_space<vmem>>, %arg5: memref<16x64xbf16, #tpu.memory_space<vmem>>, %arg6: memref<16x64xbf16, #tpu.memory_space<vmem>>, %arg7: memref<16x64xf32, #tpu.memory_space<vmem>>) attributes {dimension_semantics = [#tpu.dimension_semantics<parallel>, #tpu.dimension_semantics<parallel>, #tpu.dimension_semantics<arbitrary>], iteration_bounds = array<i64: 1, 1, 1>, scalar_prefetch = 0 : i64, scratch_operands = 1 : i64, tpu.core_type = #tpu.core_type<tc>, window_params = [{transform_indices = @transform_0, window_bounds = array<i64: 16, 128>}, {transform_indices = @transform_1, window_bounds = array<i64: 128, 64>}, {transform_indices = @transform_2, window_bounds = array<i64: 16, 64>}, {transform_indices = @transform_3, window_bounds = array<i64: 16, 64>}]} {
    %c0_i32 = arith.constant 0 : i32
    %0 = arith.cmpi eq, %arg2, %c0_i32 : i32
    %1 = arith.extui %0 : i1 to i32
    %c0_i32_0 = arith.constant 0 : i32
    %2 = arith.cmpi ne, %1, %c0_i32_0 : i32
    scf.if %2 {
      %c0_10 = arith.constant 0 : index
      %c0_11 = arith.constant 0 : index
      %12 = vector.load %arg5[%c0_10, %c0_11] : memref<16x64xbf16, #tpu.memory_space<vmem>>, vector<16x64xbf16>
      %13 = arith.extf %12 : vector<16x64xbf16> to vector<16x64xf32>
      %c0_12 = arith.constant 0 : index
      %c0_13 = arith.constant 0 : index
      %14 = vector.load %arg7[%c0_12, %c0_13] : memref<16x64xf32, #tpu.memory_space<vmem>>, vector<16x64xf32>
      tpu.vector_store %arg7[%c0_12, %c0_13], %13 {strides = array<i32>} : memref<16x64xf32, #tpu.memory_space<vmem>>, vector<16x64xf32>,
    } else {
    }
    %c0 = arith.constant 0 : index
    %c0_1 = arith.constant 0 : index
    %3 = vector.load %arg7[%c0, %c0_1] : memref<16x64xf32, #tpu.memory_space<vmem>>, vector<16x64xf32>
    %c0_2 = arith.constant 0 : index
    %c0_3 = arith.constant 0 : index
    %4 = vector.load %arg3[%c0_2, %c0_3] : memref<16x128xbf16, #tpu.memory_space<vmem>>, vector<16x128xbf16>
    %c0_4 = arith.constant 0 : index
    %c0_5 = arith.constant 0 : index
    %5 = vector.load %arg4[%c0_4, %c0_5] : memref<128x64xbf16, #tpu.memory_space<vmem>>, vector<128x64xbf16>
    %cst = arith.constant dense<0.000000e+00> : vector<16x64xf32>
    %6 = tpu.matmul %4, %5, %cst {dimension_numbers = #tpu.dot_dimension_numbers<[1], [0], [0], [1], [0, 0, 1, 1], [], []>} : vector<16x128xbf16>, vector<128x64xbf16>, vector<16x64xf32> -> vector<16x64xf32>
    %7 = arith.addf %3, %6 : vector<16x64xf32>
    %c0_6 = arith.constant 0 : index
    %c0_7 = arith.constant 0 : index
    %8 = vector.load %arg7[%c0_6, %c0_7] : memref<16x64xf32, #tpu.memory_space<vmem>>, vector<16x64xf32>
    tpu.vector_store %arg7[%c0_6, %c0_7], %7 {strides = array<i32>} : memref<16x64xf32, #tpu.memory_space<vmem>>, vector<16x64xf32>,
    %c0_i32_8 = arith.constant 0 : i32
    %9 = arith.cmpi eq, %arg2, %c0_i32_8 : i32
    %10 = arith.extui %9 : i1 to i32
    %c0_i32_9 = arith.constant 0 : i32
    %11 = arith.cmpi ne, %10, %c0_i32_9 : i32
    scf.if %11 {
      %c0_10 = arith.constant 0 : index
      %c0_11 = arith.constant 0 : index
      %12 = vector.load %arg7[%c0_10, %c0_11] : memref<16x64xf32, #tpu.memory_space<vmem>>, vector<16x64xf32>
      %13 = arith.truncf %12 : vector<16x64xf32> to vector<16x64xbf16>
      %c0_12 = arith.constant 0 : index
      %c0_13 = arith.constant 0 : index
      %14 = vector.load %arg6[%c0_12, %c0_13] : memref<16x64xbf16, #tpu.memory_space<vmem>>, vector<16x64xbf16>
      tpu.vector_store %arg6[%c0_12, %c0_13], %13 {strides = array<i32>} : memref<16x64xbf16, #tpu.memory_space<vmem>>, vector<16x64xbf16>,
    } else {
    }
    return
  }
  func.func @transform_0(%arg0: i32, %arg1: i32, %arg2: i32) -> (i32, i32) {
    %c0_i32 = arith.constant 0 : i32
    return %arg0, %arg2 : i32, i32
  }
  func.func @transform_1(%arg0: i32, %arg1: i32, %arg2: i32) -> (i32, i32) {
    %c0_i32 = arith.constant 0 : i32
    return %arg2, %arg1 : i32, i32
  }
  func.func @transform_2(%arg0: i32, %arg1: i32, %arg2: i32) -> (i32, i32) {
    %c0_i32 = arith.constant 0 : i32
    return %arg0, %arg1 : i32, i32
  }
  func.func @transform_3(%arg0: i32, %arg1: i32, %arg2: i32) -> (i32, i32) {
    %c0_i32 = arith.constant 0 : i32
    return %arg0, %arg1 : i32, i32
  }
}

module attributes {stable_mosaic.version = 11 : i64} {
  func.func @_rmsnorm_matmul_kernel(%arg0: i32, %arg1: i32, %arg2: memref<16x64xbf16, #tpu.memory_space<vmem>>, %arg3: memref<1x64xf32, #tpu.memory_space<vmem>>, %arg4: memref<64x256xbf16, #tpu.memory_space<vmem>>, %arg5: memref<16x256xf32, #tpu.memory_space<vmem>>, %arg6: memref<16x64xbf16, #tpu.memory_space<vmem>>) attributes {dimension_semantics = [#tpu.dimension_semantics<parallel>, #tpu.dimension_semantics<arbitrary>], iteration_bounds = array<i64: 1, 1>, scalar_prefetch = 0 : i64, scratch_operands = 1 : i64, tpu.core_type = #tpu.core_type<tc>, window_params = [{transform_indices = @transform_0, window_bounds = array<i64: 16, 64>}, {pipeline_mode = #tpu.pipeline_mode<synchronous>, transform_indices = @transform_1, window_bounds = array<i64: 1, 64>}, {transform_indices = @transform_2, window_bounds = array<i64: 64, 256>}, {transform_indices = @transform_3, window_bounds = array<i64: 16, 256>}]} {
    %c0_i32 = arith.constant 0 : i32
    %0 = arith.cmpi eq, %arg1, %c0_i32 : i32
    %1 = arith.extui %0 : i1 to i32
    %c0_i32_0 = arith.constant 0 : i32
    %2 = arith.cmpi ne, %1, %c0_i32_0 : i32
    scf.if %2 {
      %c0_6 = arith.constant 0 : index
      %c0_7 = arith.constant 0 : index
      %7 = vector.load %arg2[%c0_6, %c0_7] : memref<16x64xbf16, #tpu.memory_space<vmem>>, vector<16x64xbf16>
      %8 = arith.extf %7 : vector<16x64xbf16> to vector<16x64xf32>
      %9 = arith.mulf %8, %8 : vector<16x64xf32>
      %cst_8 = arith.constant dense<0.000000e+00> : vector<16xf32>
      %10 = vector.multi_reduction <add>, %9, %cst_8 [1] : vector<16x64xf32> to vector<16xf32>
      %11 = vector.shape_cast %10 : vector<16xf32> to vector<16x1xf32>
      %cst_9 = arith.constant 6.400000e+01 : f32
      %12 = vector.broadcast %cst_9 : f32 to vector<16x1xf32>
      %13 = arith.divf %11, %12 : vector<16x1xf32>
      %cst_10 = arith.constant 9.99999974E-6 : f32
      %14 = vector.broadcast %cst_10 : f32 to vector<16x1xf32>
      %15 = arith.addf %13, %14 : vector<16x1xf32>
      %16 = math.rsqrt %15 : vector<16x1xf32>
      %17 = vector.broadcast %16 : vector<16x1xf32> to vector<16x64xf32>
      %18 = arith.mulf %8, %17 : vector<16x64xf32>
      %c0_11 = arith.constant 0 : index
      %c0_12 = arith.constant 0 : index
      %19 = vector.load %arg3[%c0_11, %c0_12] : memref<1x64xf32, #tpu.memory_space<vmem>>, vector<1x64xf32>
      %20 = vector.broadcast %19 : vector<1x64xf32> to vector<16x64xf32>
      %21 = arith.mulf %18, %20 : vector<16x64xf32>
      %22 = arith.truncf %21 : vector<16x64xf32> to vector<16x64xbf16>
      %c0_13 = arith.constant 0 : index
      %c0_14 = arith.constant 0 : index
      %23 = vector.load %arg6[%c0_13, %c0_14] : memref<16x64xbf16, #tpu.memory_space<vmem>>, vector<16x64xbf16>
      tpu.vector_store %arg6[%c0_13, %c0_14], %22 {strides = array<i32>} : memref<16x64xbf16, #tpu.memory_space<vmem>>, vector<16x64xbf16>,
    } else {
    }
    %c0 = arith.constant 0 : index
    %c0_1 = arith.constant 0 : index
    %3 = vector.load %arg6[%c0, %c0_1] : memref<16x64xbf16, #tpu.memory_space<vmem>>, vector<16x64xbf16>
    %c0_2 = arith.constant 0 : index
    %c0_3 = arith.constant 0 : index
    %4 = vector.load %arg4[%c0_2, %c0_3] : memref<64x256xbf16, #tpu.memory_space<vmem>>, vector<64x256xbf16>
    %cst = arith.constant dense<0.000000e+00> : vector<16x256xf32>
    %5 = tpu.matmul %3, %4, %cst {dimension_numbers = #tpu.dot_dimension_numbers<[1], [0], [0], [1], [0, 0, 1, 1], [], []>} : vector<16x64xbf16>, vector<64x256xbf16>, vector<16x256xf32> -> vector<16x256xf32>
    %c0_4 = arith.constant 0 : index
    %c0_5 = arith.constant 0 : index
    %6 = vector.load %arg5[%c0_4, %c0_5] : memref<16x256xf32, #tpu.memory_space<vmem>>, vector<16x256xf32>
    tpu.vector_store %arg5[%c0_4, %c0_5], %5 {strides = array<i32>} : memref<16x256xf32, #tpu.memory_space<vmem>>, vector<16x256xf32>,
    return
  }
  func.func @transform_0(%arg0: i32, %arg1: i32) -> (i32, i32) {
    %c0_i32 = arith.constant 0 : i32
    %c0_i32_0 = arith.constant 0 : i32
    return %arg0, %c0_i32 : i32, i32
  }
  func.func @transform_1(%arg0: i32, %arg1: i32) -> (i32, i32) {
    %c0_i32 = arith.constant 0 : i32
    %c0_i32_0 = arith.constant 0 : i32
    %c0_i32_1 = arith.constant 0 : i32
    return %c0_i32, %c0_i32_0 : i32, i32
  }
  func.func @transform_2(%arg0: i32, %arg1: i32) -> (i32, i32) {
    %c0_i32 = arith.constant 0 : i32
    %c0_i32_0 = arith.constant 0 : i32
    return %c0_i32, %arg1 : i32, i32
  }
  func.func @transform_3(%arg0: i32, %arg1: i32) -> (i32, i32) {
    %c0_i32 = arith.constant 0 : i32
    return %arg0, %arg1 : i32, i32
  }
}

</mosaic_0001>

<llo_original>
// kernel: fp8_llama_forward.13
$region0: #{fp8_llama_forward.13}
  #allocation0 [shape = 'u32[]', space=smem, size = 0x4, offset = 0x4, fixed_abs, tag = 'smem constant byte address 0x4 - core index']
  #allocation1 [shape = 'u32[72,128]{1,0:T(1,128)}', space=vmem, size = 0x9000, scoped, tag = 'internal scratch']
  #allocation2 [shape = 'f32[8,64]{1,0:T(8,128)}', space=vmem, size = 0x1000, scoped, tag = 'scratch operand']
  %s0 = inlined_call_operand.vmem [shape: bf16[2,2,8,32], index: 0, kind: input, shape index: {}]
  %s1 = inlined_call_operand.vmem [shape: bf16[64,64], index: 1, kind: input, shape index: {}]
  %s2 = inlined_call_operand.vmem [shape: bf16[16,64], index: 2, kind: input, shape index: {}]
  %s3 = inlined_call_operand.vmem [shape: bf16[16,64], index: 3, kind: output, shape index: {}]
  %s4 = sld [smem:[#allocation0]]
  $region53: #{fp8_llama_forward.13} parent=0
    _
  %s6 = ssub.s32 1, %s4
  %s7 = scalar_select 0, %s6, %s4
  loop: start=0, step=1, limit=6
  $region2: #{fp8_llama_forward.13} parent=0 // loop_pre_header
    _
  $region3: #{fp8_llama_forward.13} parent=0 // loop_header
    %s9 = sphi 0, %s13
    %p10 = scmp.ge.s32.totalorder %s9, 6
    %s16 = sphi 0, %s35
    %s17 = sphi 0, %s31
    %s18 = sphi 0, %s27
    %s19 = sphi 0, %s16
    %s20 = sphi 0, %s17
    %s21 = sphi 0, %s18
    %s22 = sphi 0, %s19
    %s23 = sphi 0, %s20
    %s24 = sphi 0, %s21
    %s40 = sphi 0, %s42
    %s43 = sphi 0, %s40
    %s44 = sphi 0, %s43
    %s60 = sphi 0, %s44
    %s68 = sphi 0, %s70
    %s71 = sphi 0, %s68
    %s72 = sphi 0, %s71
    %s88 = sphi 0, %s72
    %s96 = sphi 0, %s98
    %s99 = sphi 0, %s96
    %s100 = sphi 0, %s99
    %s116 = sphi 0, %s100
    %s124 = sphi 0, %s126
    %s127 = sphi 0, %s124
    %s128 = sphi 0, %s127
    %s144 = sphi 0, %s128
  $region4: #{fp8_llama_forward.13} parent=0 // loop_header_branch
    %12 = sbr.rel (%p10) target = $region8
  $region5: #{fp8_llama_forward.13} parent=0 // loop_body
    %s14 = ssub.s32 %s9, 1
    %s15 = ssub.s32 %s9, 2
    %s25 = sadd.s32 1, %s18
    %p26 = scmp.ge.s32.totalorder %s25, 2
    %s27 = scalar_select %p26, 0, %s25
    %s28 = sadd.s32 1, %s17
    %s29 = scalar_select %p26, %s28, %s17
    %p30 = scmp.ge.s32.totalorder %s29, 1
    %s31 = scalar_select %p30, 0, %s29
    %s32 = sadd.s32 1, %s16
    %s33 = scalar_select %p30, %s32, %s16
    %p34 = scmp.ge.s32.totalorder %s33, 2
    %s35 = scalar_select %p34, 0, %s33
    %s36 = ssub.s32 %s16, %s35
    %s37 = ssub.s32 %s18, %s27
    %s38 = sor.u32 %s36, %s37
    %p39 = scmp.eq.s32.totalorder %s38, 0
    %s41 = sadd.s32 %s40, 1
    %s42 = scalar_select %p39, %s40, %s41
    %p45 = pneg %p39
    %p46 = scmp.eq.s32.totalorder %s9, 3
    %p47 = por %p45, %p46
    %p48 = scmp.ne.s32.totalorder %s40, %s43
    %p49 = scmp.eq.s32.totalorder %s9, 0
    %p50 = por %p48, %p49
    %p51 = scmp.ne.s32.totalorder %s40, %s43
    %p52 = scmp.eq.s32.totalorder %s14, 3
    %p53 = por %p51, %p52
    %p54 = scmp.ne.s32.totalorder %s43, %s44
    %p55 = scmp.eq.s32.totalorder %s14, 0
    %p56 = por %p54, %p55
    %p57 = scmp.ne.s32.totalorder %s43, %s44
    %p58 = scmp.eq.s32.totalorder %s15, 3
    %p59 = por %p57, %p58
    %p61 = scmp.ne.s32.totalorder %s44, %s60
    %p62 = scmp.eq.s32.totalorder %s15, 0
    %p63 = por %p61, %p62
    %s64 = ssub.s32 %s18, %s27
    %s65 = ssub.s32 %s17, %s31
    %s66 = sor.u32 %s64, %s65
    %p67 = scmp.eq.s32.totalorder %s66, 0
    %s69 = sadd.s32 %s68, 1
    %s70 = scalar_select %p67, %s68, %s69
    %p73 = pneg %p67
    %p74 = scmp.eq.s32.totalorder %s9, 3
    %p75 = por %p73, %p74
    %p76 = scmp.ne.s32.totalorder %s68, %s71
    %p77 = scmp.eq.s32.totalorder %s9, 0
    %p78 = por %p76, %p77
    %p79 = scmp.ne.s32.totalorder %s68, %s71
    %p80 = scmp.eq.s32.totalorder %s14, 3
    %p81 = por %p79, %p80
    %p82 = scmp.ne.s32.totalorder %s71, %s72
    %p83 = scmp.eq.s32.totalorder %s14, 0
    %p84 = por %p82, %p83
    %p85 = scmp.ne.s32.totalorder %s71, %s72
    %p86 = scmp.eq.s32.totalorder %s15, 3
    %p87 = por %p85, %p86
    %p89 = scmp.ne.s32.totalorder %s72, %s88
    %p90 = scmp.eq.s32.totalorder %s15, 0
    %p91 = por %p89, %p90
    %s92 = ssub.s32 %s16, %s35
    %s93 = ssub.s32 %s17, %s31
    %s94 = sor.u32 %s92, %s93
    %p95 = scmp.eq.s32.totalorder %s94, 0
    %s97 = sadd.s32 %s96, 1
    %s98 = scalar_select %p95, %s96, %s97
    %p101 = pneg %p95
    %p102 = scmp.eq.s32.totalorder %s9, 3
    %p103 = por %p101, %p102
    %p104 = scmp.ne.s32.totalorder %s96, %s99
    %p105 = scmp.eq.s32.totalorder %s9, 0
    %p106 = por %p104, %p105
    %p107 = scmp.ne.s32.totalorder %s96, %s99
    %p108 = scmp.eq.s32.totalorder %s14, 3
    %p109 = por %p107, %p108
    %p110 = scmp.ne.s32.totalorder %s99, %s100
    %p111 = scmp.eq.s32.totalorder %s14, 0
    %p112 = por %p110, %p111
    %p113 = scmp.ne.s32.totalorder %s99, %s100
    %p114 = scmp.eq.s32.totalorder %s15, 3
    %p115 = por %p113, %p114
    %p117 = scmp.ne.s32.totalorder %s100, %s116
    %p118 = scmp.eq.s32.totalorder %s15, 0
    %p119 = por %p117, %p118
    %s120 = ssub.s32 %s16, %s35
    %s121 = ssub.s32 %s17, %s31
    %s122 = sor.u32 %s120, %s121
    %p123 = scmp.eq.s32.totalorder %s122, 0
    %s125 = sadd.s32 %s124, 1
    %s126 = scalar_select %p123, %s124, %s125
    %p129 = pneg %p123
    %p130 = scmp.eq.s32.totalorder %s9, 3
    %p131 = por %p129, %p130
    %p132 = scmp.ne.s32.totalorder %s124, %s127
    %p133 = scmp.eq.s32.totalorder %s9, 0
    %p134 = por %p132, %p133
    %p135 = scmp.ne.s32.totalorder %s124, %s127
    %p136 = scmp.eq.s32.totalorder %s14, 3
    %p137 = por %p135, %p136
    %p138 = scmp.ne.s32.totalorder %s127, %s128
    %p139 = scmp.eq.s32.totalorder %s14, 0
    %p140 = por %p138, %p139
    %p141 = scmp.ne.s32.totalorder %s127, %s128
    %p142 = scmp.eq.s32.totalorder %s15, 3
    %p143 = por %p141, %p142
    %p145 = scmp.ne.s32.totalorder %s128, %s144
    %p146 = scmp.eq.s32.totalorder %s15, 0
    %p147 = por %p145, %p146
    %p148 = scmp.le.s32.totalorder 1, %s9
    %p149 = scmp.lt.s32.totalorder %s9, 5
    %p150 = pnand %p148, %p149
    %p151 = pneg %p150
    // Predicated region
    $region9: #{fp8_llama_forward.13} parent=5 // pred_check
      _
    $region10: #{fp8_llama_forward.13} parent=5 // pred_check_branch
      %153 = sbr.rel (%p150) target = $region12
    $region11: #{fp8_llama_forward.13} parent=5 // pred_region
      %s154 = ssub.s32 %s9, 1
    $region12: #{fp8_llama_forward.13} parent=5 // pred_fallthru
      _
    %p155 = scmp.lt.s32.totalorder %s9, 4
    // Predicated region
    $region13: #{fp8_llama_forward.13} parent=5 // pred_check
      %p156 = pneg %p155
    $region14: #{fp8_llama_forward.13} parent=5 // pred_check_branch
      %158 = sbr.rel (%p156) target = $region16
    $region15: #{fp8_llama_forward.13} parent=5 // pred_region
      // Predicated region
      $region17: #{fp8_llama_forward.13} parent=15 // pred_check
        %p159 = pneg %p50
      $region18: #{fp8_llama_forward.13} parent=15 // pred_check_branch
        %161 = sbr.rel (%p159) target = $region20
      $region19: #{fp8_llama_forward.13} parent=15 // pred_region
        %p162 = scmp.lt.s32.totalorder %s16, 1
        %s163 = scalar_select %p162, %s16, 1
        %p164 = scmp.lt.s32.totalorder %s18, 1
        %s165 = scalar_select %p164, %s18, 1
        %s166 = smul.addr %s163, 2
        %s167 = sadd.s32 %s165, %s166
        %s168 = smul.addr %s167, 4
        %s169 = scalar_lea.vmem %s0, %s168
      $region20: #{fp8_llama_forward.13} parent=15 // pred_fallthru
        _
      // Predicated region
      $region21: #{fp8_llama_forward.13} parent=15 // pred_check
        %p170 = pneg %p78
      $region22: #{fp8_llama_forward.13} parent=15 // pred_check_branch
        %172 = sbr.rel (%p170) target = $region24
      $region23: #{fp8_llama_forward.13} parent=15 // pred_region
        %s173 = smul.u32 4, %s18
        %p174 = scmp.lt.s32.totalorder %s173, 7
        %s175 = scalar_select %p174, %s173, 7
        %p176 = scmp.lt.s32.totalorder %s17, 0
        %s177 = scalar_select %p176, %s17, 0
        %s178 = sadd.s32 %s177, %s175
        %s179 = smul.addr %s178, 4
        %s180 = scalar_lea.vmem %s1, %s179
        %s181 = smul.u32 4, %s18
      $region24: #{fp8_llama_forward.13} parent=15 // pred_fallthru
        _
      // Predicated region
      $region25: #{fp8_llama_forward.13} parent=15 // pred_check
        %p182 = pneg %p106
      $region26: #{fp8_llama_forward.13} parent=15 // pred_check_branch
        %184 = sbr.rel (%p182) target = $region28
      $region27: #{fp8_llama_forward.13} parent=15 // pred_region
        %p185 = scmp.lt.s32.totalorder %s16, 1
        %s186 = scalar_select %p185, %s16, 1
        %p187 = scmp.lt.s32.totalorder %s17, 0
        %s188 = scalar_select %p187, %s17, 0
        %s189 = sadd.s32 %s188, %s186
        %s190 = smul.addr %s189, 4
        %s191 = scalar_lea.vmem %s2, %s190
      $region28: #{fp8_llama_forward.13} parent=15 // pred_fallthru
        _
    $region16: #{fp8_llama_forward.13} parent=5 // pred_fallthru
      _
    %p192 = scmp.le.s32.totalorder 1, %s9
    %p193 = scmp.lt.s32.totalorder %s9, 5
    %p194 = pnand %p192, %p193
    %p195 = pneg %p194
    // Predicated region
    $region29: #{fp8_llama_forward.13} parent=5 // pred_check
      _
    $region30: #{fp8_llama_forward.13} parent=5 // pred_check_branch
      %197 = sbr.rel (%p194) target = $region32
    $region31: #{fp8_llama_forward.13} parent=5 // pred_region
      %s198 = ssub.s32 %s9, 1
      %p199 = scmp.lt.s32.totalorder %s19, 1
      %s200 = scalar_select %p199, %s19, 1
      %p201 = scmp.lt.s32.totalorder %s21, 1
      %s202 = scalar_select %p201, %s21, 1
      %s203 = smul.addr %s200, 2
      %s204 = sadd.s32 %s202, %s203
      %s205 = smul.addr %s204, 4
      %s206 = scalar_lea.vmem %s0, %s205
      %p207 = pneg %p56
      %p208 = pneg %p53
      %s209 = smul.u32 4, %s21
      %p210 = scmp.lt.s32.totalorder %s209, 7
      %s211 = scalar_select %p210, %s209, 7
      %p212 = scmp.lt.s32.totalorder %s20, 0
      %s213 = scalar_select %p212, %s20, 0
      %s214 = sadd.s32 %s213, %s211
      %s215 = smul.addr %s214, 4
      %s216 = scalar_lea.vmem %s1, %s215
      %p217 = pneg %p84
      %p218 = pneg %p81
      %p219 = scmp.lt.s32.totalorder %s19, 1
      %s220 = scalar_select %p219, %s19, 1
      %p221 = scmp.lt.s32.totalorder %s20, 0
      %s222 = scalar_select %p221, %s20, 0
      %s223 = sadd.s32 %s222, %s220
      %s224 = smul.addr %s223, 4
      %s225 = scalar_lea.vmem %s2, %s224
      %p226 = pneg %p112
      %p227 = pneg %p109
      %p228 = pneg %p140
      %p229 = pneg %p137
      %p230 = scmp.lt.s32.totalorder %s19, 1
      %s231 = scalar_select %p230, %s19, 1
      %p232 = scmp.lt.s32.totalorder %s20, 0
      %s233 = scalar_select %p232, %s20, 0
      %s234 = sadd.s32 %s233, %s231
      %s235 = smul.addr %s234, 4
      %s236 = scalar_lea.vmem %s3, %s235
      %p237 = scmp.lt.s32.totalorder %s19, 1
      %s238 = scalar_select %p237, %s19, 1
      %p239 = scmp.lt.s32.totalorder %s21, 1
      %s240 = scalar_select %p239, %s21, 1
      %s241 = smul.addr %s238, 2
      %s242 = sadd.s32 %s240, %s241
      %s243 = smul.addr %s242, 4
      %s244 = scalar_lea.vmem %s0, %s243
      %s245 = smul.u32 4, %s21
      %p246 = scmp.lt.s32.totalorder %s245, 7
      %s247 = scalar_select %p246, %s245, 7
      %p248 = scmp.lt.s32.totalorder %s20, 0
      %s249 = scalar_select %p248, %s20, 0
      %s250 = sadd.s32 %s249, %s247
      %s251 = smul.addr %s250, 4
      %s252 = scalar_lea.vmem %s1, %s251
      %s253 = smul.u32 4, %s21
      %p254 = scmp.lt.s32.totalorder %s19, 1
      %s255 = scalar_select %p254, %s19, 1
      %p256 = scmp.lt.s32.totalorder %s20, 0
      %s257 = scalar_select %p256, %s20, 0
      %s258 = sadd.s32 %s257, %s255
      %s259 = smul.addr %s258, 4
      %s260 = scalar_lea.vmem %s2, %s259
      %p261 = scmp.lt.s32.totalorder %s19, 1
      %s262 = scalar_select %p261, %s19, 1
      %p263 = scmp.lt.s32.totalorder %s20, 0
      %s264 = scalar_select %p263, %s20, 0
      %s265 = sadd.s32 %s264, %s262
      %s266 = smul.addr %s265, 4
      %s267 = scalar_lea.vmem %s3, %s266
      %p269 = scmp.eq.s32.totalorder %s21, 0
      // Predicated region
      $region33: #{fp8_llama_forward.13} parent=31 // pred_check
        %p270 = pneg %p269
      $region34: #{fp8_llama_forward.13} parent=31 // pred_check_branch
        %272 = sbr.rel (%p270) target = $region36
      $region35: #{fp8_llama_forward.13} parent=31 // pred_region
        %v273 = vld [vmem:[%s260] sm:$0xf]
        %v274 = vunpack.c.l.bf16 %v273
        %vm275 = vcmask 523264
        %276 = vst.msk [vmem:[#allocation2] sm:$0xff] %vm275, %v274
      $region36: #{fp8_llama_forward.13} parent=31 // pred_fallthru
        _
      %v277 = vld [vmem:[#allocation2] sm:$0xff]
      %v278 = vld [vmem:[%s244] sm:$0xf]
      %v279 = vld [vmem:[%s252] sm:$0xf]
      %v280 = vld [vmem:[%s252 + $0x4] sm:$0xf]
      %v281 = vld [vmem:[%s252 + $0x8] sm:$0xf]
      %v282 = vld [vmem:[%s252 + $0xc] sm:$0xf]
      %v287 = vunpack.c.l.b16 %v279
      %v288 = vunpack.c.l.b16 %v280
      %v289 = vunpack.c.l.b16 %v281
      %v290 = vunpack.c.l.b16 %v282
      %v291 = vpack.c.b16 %v288, %v287
      %v292 = vpack.c.b16 %v290, %v289
      %vm295 = vcmask 261120
      %v297 = vsel %vm295, %v278, 0
      %299 = vmatpush.bf16.msra.mxu0 0
      %300 = vmatpush.bf16.msra.mxu0 0
      %301 = vmatpush.bf16.msra.mxu0 0
      %302 = vmatpush.bf16.msra.mxu0 0
      %303 = vmatpush.bf16.msra.mxu0 0
      %304 = vmatpush.bf16.msra.mxu0 0
      %305 = vmatpush.bf16.msra.mxu0 %v292
      %306 = vmatpush.bf16.msra.mxu0 %v291
      %307 = vmatmul.bf16.gmra.mxu0 %v297
      %v308 = vpop.f32.mrf.mxu0
      %v309 = vadd.f32 0.0, %v308
      %v310 = vpop.f32.mrf.mxu0
      %311 = vdwg.mxu0
      %v312 = vadd.f32 %v277, %v309
      %vm313 = vcmask 523264
      %314 = vst.msk [vmem:[#allocation2] sm:$0xff] %vm313, %v312
      %p315 = scmp.eq.s32.totalorder %s21, 1
      // Predicated region
      $region37: #{fp8_llama_forward.13} parent=31 // pred_check
        %p316 = pneg %p315
      $region38: #{fp8_llama_forward.13} parent=31 // pred_check_branch
        %318 = sbr.rel (%p316) target = $region40
      $region39: #{fp8_llama_forward.13} parent=31 // pred_region
        %v319 = vld [vmem:[#allocation2] sm:$0xff]
        %v320 = vpack.c.bf16 %v319, %v319
        %vm321 = vcmask 519168
        %322 = vst.msk [vmem:[%s267] sm:$0xf] %vm321, %v320
      $region40: #{fp8_llama_forward.13} parent=31 // pred_fallthru
        _
      %p323 = scmp.lt.s32.totalorder %s19, 1
      %s324 = scalar_select %p323, %s19, 1
      %p325 = scmp.lt.s32.totalorder %s20, 0
      %s326 = scalar_select %p325, %s20, 0
      %s327 = sadd.s32 %s326, %s324
      %s328 = smul.addr %s327, 4
      %s329 = scalar_lea.vmem %s3, %s328
      // Predicated region
      $region41: #{fp8_llama_forward.13} parent=31 // pred_check
        %p330 = pneg %p137
      $region42: #{fp8_llama_forward.13} parent=31 // pred_check_branch
        %332 = sbr.rel (%p330) target = $region44
      $region43: #{fp8_llama_forward.13} parent=31 // pred_region
        _
      $region44: #{fp8_llama_forward.13} parent=31 // pred_fallthru
        _
    $region32: #{fp8_llama_forward.13} parent=5 // pred_fallthru
      _
    %p333 = scmp.le.s32.totalorder 2, %s9
    // Predicated region
    $region45: #{fp8_llama_forward.13} parent=5 // pred_check
      %p334 = pneg %p333
    $region46: #{fp8_llama_forward.13} parent=5 // pred_check_branch
      %336 = sbr.rel (%p334) target = $region48
    $region47: #{fp8_llama_forward.13} parent=5 // pred_region
      %s337 = ssub.s32 %s9, 2
      // Predicated region
      $region49: #{fp8_llama_forward.13} parent=47 // pred_check
        %p338 = pneg %p143
      $region50: #{fp8_llama_forward.13} parent=47 // pred_check_branch
        %340 = sbr.rel (%p338) target = $region52
      $region51: #{fp8_llama_forward.13} parent=47 // pred_region
        %p341 = scmp.lt.s32.totalorder %s22, 1
        %s342 = scalar_select %p341, %s22, 1
        %p343 = scmp.lt.s32.totalorder %s23, 0
        %s344 = scalar_select %p343, %s23, 0
        %s345 = sadd.s32 %s344, %s342
        %s346 = smul.addr %s345, 4
        %s347 = scalar_lea.vmem %s3, %s346
      $region52: #{fp8_llama_forward.13} parent=47 // pred_fallthru
        _
    $region48: #{fp8_llama_forward.13} parent=5 // pred_fallthru
      _
  $region6: #{fp8_llama_forward.13} parent=0 // loop_footer
    %s13 = sadd.s32 1, %s9
  $region7: #{fp8_llama_forward.13} parent=0 // loop_footer_branch
    %8 = sbr.rel target = $region3
  $region8: #{fp8_llama_forward.13} parent=0 // loop_exit
    _

// kernel: fp8_llama_forward.11
$region0: #{fp8_llama_forward.11}
  #allocation0 [shape = 'u32[]', space=smem, size = 0x4, offset = 0x4, fixed_abs, tag = 'smem constant byte address 0x4 - core index']
  #allocation1 [shape = 'u32[72,128]{1,0:T(1,128)}', space=vmem, size = 0x9000, scoped, tag = 'internal scratch']
  #allocation2 [shape = 'bf16[16,64]{1,0:T(8,128)(2,1)}', space=vmem, size = 0x1000, scoped, tag = 'scratch operand']
  %s0 = inlined_call_operand.vmem [shape: bf16[16,64], index: 0, kind: input, shape index: {}]
  %s1 = inlined_call_operand.vmem [shape: f32[1,64], index: 1, kind: input, shape index: {}]
  %s2 = inlined_call_operand.vmem [shape: bf16[64,128], index: 2, kind: input, shape index: {}]
  %s3 = inlined_call_operand.vmem [shape: bf16[16,128], index: 3, kind: output, shape index: {}]
  %s4 = sld [smem:[#allocation0]]
  $region26: #{fp8_llama_forward.11} parent=0
    _
  %s6 = ssub.s32 1, %s4
  %s7 = scalar_select 0, %s6, %s4
  // Predicated region
  $region2: #{fp8_llama_forward.11} parent=0 // pred_check
    _
  $region3: #{fp8_llama_forward.11} parent=0 // pred_check_branch
    %9 = sbr.rel (0) target = $region5
  $region4: #{fp8_llama_forward.11} parent=0 // pred_region
    _
  $region5: #{fp8_llama_forward.11} parent=0 // pred_fallthru
    _
  // Predicated region
  $region6: #{fp8_llama_forward.11} parent=0 // pred_check
    _
  $region7: #{fp8_llama_forward.11} parent=0 // pred_check_branch
    %11 = sbr.rel (0) target = $region9
  $region8: #{fp8_llama_forward.11} parent=0 // pred_region
    _
  $region9: #{fp8_llama_forward.11} parent=0 // pred_fallthru
    _
  // Predicated region
  $region10: #{fp8_llama_forward.11} parent=0 // pred_check
    _
  $region11: #{fp8_llama_forward.11} parent=0 // pred_check_branch
    %13 = sbr.rel (0) target = $region13
  $region12: #{fp8_llama_forward.11} parent=0 // pred_region
    _
  $region13: #{fp8_llama_forward.11} parent=0 // pred_fallthru
    _
  %p15 = scmp.eq.s32.totalorder 0, 0
  // Predicated region
  $region14: #{fp8_llama_forward.11} parent=0 // pred_check
    %p16 = pneg %p15
  $region15: #{fp8_llama_forward.11} parent=0 // pred_check_branch
    %18 = sbr.rel (%p16) target = $region17
  $region16: #{fp8_llama_forward.11} parent=0 // pred_region
    %v19 = vld [vmem:[%s0] sm:$0xf]
    %v20 = vld [vmem:[%s0 + $0x4] sm:$0xf]
    %v21 = vunpack.c.l.bf16 %v19
    %v22 = vunpack.c.l.bf16 %v20
    %v23 = vmul.f32 %v21, %v21
    %v24 = vmul.f32 %v22, %v22
    %vm25 = vcmask 523264
    %v26 = vsel %vm25, %v23, 0.0
    %27 = vadd.xlane.f32.xlu0 %v26
    %v28 = vpop.xlane.xlu0 %27
    %v29 = vsel %vm25, %v24, 0.0
    %30 = vadd.xlane.f32.xlu0 %v29
    %v31 = vpop.xlane.xlu0 %30
    %v32 = vrcp.pop 64.0
    %v33 = vmul.f32 64.0, %v32
    %v34 = vsub.f32 1.0, %v33
    %v35 = vmul.f32 %v32, %v34
    %v36 = vadd.f32 %v32, %v35
    %vm37 = vweird.f32 %v32
    %v38 = vsel %vm37, %v32, %v36
    %v39 = vmul.f32 %v28, %v38
    %v40 = vmul.f32 %v31, %v38
    %v41 = vadd.f32 %v39, 1e-05
    %v42 = vadd.f32 %v40, 1e-05
    %v43 = vrsqrt.pop %v41
    %v44 = vmul.f32 %v43, %v41
    %v45 = vmul.f32 %v44, %v43
    %v46 = vmul.f32 0.5, %v45
    %v47 = vsub.f32 1.5, %v46
    %v48 = vmul.f32 %v43, %v47
    %vm49 = vweird.f32 %v41
    %vm50 = vweird.f32 %v43
    %vm51 = vmor %vm49, %vm50
    %v52 = vsel %vm51, %v43, %v48
    %v53 = vrsqrt.pop %v42
    %v54 = vmul.f32 %v53, %v42
    %v55 = vmul.f32 %v54, %v53
    %v56 = vmul.f32 0.5, %v55
    %v57 = vsub.f32 1.5, %v56
    %v58 = vmul.f32 %v53, %v57
    %vm59 = vweird.f32 %v42
    %vm60 = vweird.f32 %v53
    %vm61 = vmor %vm59, %vm60
    %v62 = vsel %vm61, %v53, %v58
    %v63 = vmul.f32 %v21, %v52
    %v64 = vmul.f32 %v22, %v62
    %v65 = vld [vmem:[%s1] sm:$0x1]
    %v67 = vperm.slane %v65, 0
    %v69 = vmul.f32 %v63, %v67
    %v70 = vmul.f32 %v64, %v67
    %v71 = vpack.c.bf16 %v69, %v69
    %v72 = vpack.c.bf16 %v70, %v70
    %vm73 = vcmask 519168
    %74 = vst.msk [vmem:[#allocation2] sm:$0xf] %vm73, %v71
    %75 = vst.msk [vmem:[#allocation2 + $0x4] sm:$0xf] %vm73, %v72
  $region17: #{fp8_llama_forward.11} parent=0 // pred_fallthru
    _
  %v76 = vld [vmem:[#allocation2] sm:$0xf]
  %v77 = vld [vmem:[#allocation2 + $0x4] sm:$0xf]
  %v78 = vld [vmem:[%s2] sm:$0xf]
  %v79 = vld [vmem:[%s2 + $0x4] sm:$0xf]
  %v80 = vld [vmem:[%s2 + $0x8] sm:$0xf]
  %v81 = vld [vmem:[%s2 + $0xc] sm:$0xf]
  %v82 = vld [vmem:[%s2 + $0x10] sm:$0xf]
  %v83 = vld [vmem:[%s2 + $0x14] sm:$0xf]
  %v84 = vld [vmem:[%s2 + $0x18] sm:$0xf]
  %v85 = vld [vmem:[%s2 + $0x1c] sm:$0xf]
  %v88 = vunpack.c.l.b16 %v76
  %v89 = vunpack.c.l.b16 %v77
  %v90 = vpack.c.b16 %v89, %v88
  %v99 = vunpack.c.l.b16 %v78
  %v100 = vunpack.c.l.b16 %v79
  %v101 = vunpack.c.l.b16 %v80
  %v102 = vunpack.c.l.b16 %v81
  %v103 = vunpack.c.l.b16 %v82
  %v104 = vunpack.c.l.b16 %v83
  %v105 = vunpack.c.l.b16 %v84
  %v106 = vunpack.c.l.b16 %v85
  %v107 = vpack.c.b16 %v100, %v99
  %v108 = vpack.c.b16 %v102, %v101
  %v109 = vpack.c.b16 %v104, %v103
  %v110 = vpack.c.b16 %v106, %v105
  %vm115 = vcmask 523264
  %v117 = vsel %vm115, %v90, 0
  %119 = vmatpush.bf16.msra.mxu0 0
  %120 = vmatpush.bf16.msra.mxu0 0
  %121 = vmatpush.bf16.msra.mxu0 0
  %122 = vmatpush.bf16.msra.mxu0 0
  %123 = vmatpush.bf16.msra.mxu0 %v110
  %124 = vmatpush.bf16.msra.mxu0 %v109
  %125 = vmatpush.bf16.msra.mxu0 %v108
  %126 = vmatpush.bf16.msra.mxu0 %v107
  %127 = vmatmul.bf16.gmra.mxu0 %v117
  %v128 = vpop.f32.mrf.mxu0
  %v129 = vadd.f32 0.0, %v128
  %v130 = vpop.f32.mrf.mxu0
  %v131 = vadd.f32 0.0, %v130
  %132 = vdwg.mxu0
  %v133 = vpack.c.bf16 %v129, %v129
  %v134 = vpack.c.bf16 %v131, %v131
  %135 = vst [vmem:[%s3] sm:$0xf] %v133
  %136 = vst [vmem:[%s3 + $0x4] sm:$0xf] %v134
  // Predicated region
  $region18: #{fp8_llama_forward.11} parent=0 // pred_check
    _
  $region19: #{fp8_llama_forward.11} parent=0 // pred_check_branch
    %138 = sbr.rel (0) target = $region21
  $region20: #{fp8_llama_forward.11} parent=0 // pred_region
    _
  $region21: #{fp8_llama_forward.11} parent=0 // pred_fallthru
    _
  // Predicated region
  $region22: #{fp8_llama_forward.11} parent=0 // pred_check
    _
  $region23: #{fp8_llama_forward.11} parent=0 // pred_check_branch
    %140 = sbr.rel (0) target = $region25
  $region24: #{fp8_llama_forward.11} parent=0 // pred_region
    _
  $region25: #{fp8_llama_forward.11} parent=0 // pred_fallthru
    _

// kernel: fp8_llama_forward.12
$region0: #{fp8_llama_forward.12}
  #allocation0 [shape = 'u32[]', space=smem, size = 0x4, offset = 0x4, fixed_abs, tag = 'smem constant byte address 0x4 - core index']
  #allocation1 [shape = 'u32[72,128]{1,0:T(1,128)}', space=vmem, size = 0x9000, scoped, tag = 'internal scratch']
  %s0 = inlined_call_operand.vmem [shape: bf16[2,2,8,64], index: 0, kind: input, shape index: {}]
  %s1 = inlined_call_operand.vmem [shape: f32[8,16], index: 1, kind: input, shape index: {}]
  %s2 = inlined_call_operand.vmem [shape: f32[8,16], index: 2, kind: input, shape index: {}]
  %s3 = inlined_call_operand.vmem [shape: bf16[2,2,8,32], index: 3, kind: output, shape index: {}]
  %s4 = sld [smem:[#allocation0]]
  $region45: #{fp8_llama_forward.12} parent=0
    _
  %s6 = ssub.s32 1, %s4
  %s7 = scalar_select 0, %s6, %s4
  loop: start=0, step=1, limit=6
  $region2: #{fp8_llama_forward.12} parent=0 // loop_pre_header
    _
  $region3: #{fp8_llama_forward.12} parent=0 // loop_header
    %s9 = sphi 0, %s13
    %p10 = scmp.ge.s32.totalorder %s9, 6
    %s16 = sphi 0, %s28
    %s17 = sphi 0, %s24
    %s18 = sphi 0, %s16
    %s19 = sphi 0, %s17
    %s20 = sphi 0, %s18
    %s21 = sphi 0, %s19
    %s33 = sphi 0, %s35
    %s36 = sphi 0, %s33
    %s37 = sphi 0, %s36
    %s53 = sphi 0, %s37
    %s57 = sphi 0, %s57
    %s59 = sphi 0, %s57
    %s60 = sphi 0, %s59
    %s74 = sphi 0, %s60
    %s78 = sphi 0, %s78
    %s80 = sphi 0, %s78
    %s81 = sphi 0, %s80
    %s95 = sphi 0, %s81
    %s103 = sphi 0, %s105
    %s106 = sphi 0, %s103
    %s107 = sphi 0, %s106
    %s123 = sphi 0, %s107
  $region4: #{fp8_llama_forward.12} parent=0 // loop_header_branch
    %12 = sbr.rel (%p10) target = $region8
  $region5: #{fp8_llama_forward.12} parent=0 // loop_body
    %s14 = ssub.s32 %s9, 1
    %s15 = ssub.s32 %s9, 2
    %s22 = sadd.s32 1, %s17
    %p23 = scmp.ge.s32.totalorder %s22, 2
    %s24 = scalar_select %p23, 0, %s22
    %s25 = sadd.s32 1, %s16
    %s26 = scalar_select %p23, %s25, %s16
    %p27 = scmp.ge.s32.totalorder %s26, 2
    %s28 = scalar_select %p27, 0, %s26
    %s29 = ssub.s32 %s16, %s28
    %s30 = ssub.s32 %s17, %s24
    %s31 = sor.u32 %s29, %s30
    %p32 = scmp.eq.s32.totalorder %s31, 0
    %s34 = sadd.s32 %s33, 1
    %s35 = scalar_select %p32, %s33, %s34
    %p38 = pneg %p32
    %p39 = scmp.eq.s32.totalorder %s9, 3
    %p40 = por %p38, %p39
    %p41 = scmp.ne.s32.totalorder %s33, %s36
    %p42 = scmp.eq.s32.totalorder %s9, 0
    %p43 = por %p41, %p42
    %p44 = scmp.ne.s32.totalorder %s33, %s36
    %p45 = scmp.eq.s32.totalorder %s14, 3
    %p46 = por %p44, %p45
    %p47 = scmp.ne.s32.totalorder %s36, %s37
    %p48 = scmp.eq.s32.totalorder %s14, 0
    %p49 = por %p47, %p48
    %p50 = scmp.ne.s32.totalorder %s36, %s37
    %p51 = scmp.eq.s32.totalorder %s15, 3
    %p52 = por %p50, %p51
    %p54 = scmp.ne.s32.totalorder %s37, %s53
    %p55 = scmp.eq.s32.totalorder %s15, 0
    %p56 = por %p54, %p55
    %s58 = sadd.s32 %s57, 1
    %p61 = scmp.eq.s32.totalorder %s9, 3
    %p62 = scmp.ne.s32.totalorder %s57, %s59
    %p63 = scmp.eq.s32.totalorder %s9, 0
    %p64 = por %p62, %p63
    %p65 = scmp.ne.s32.totalorder %s57, %s59
    %p66 = scmp.eq.s32.totalorder %s14, 3
    %p67 = por %p65, %p66
    %p68 = scmp.ne.s32.totalorder %s59, %s60
    %p69 = scmp.eq.s32.totalorder %s14, 0
    %p70 = por %p68, %p69
    %p71 = scmp.ne.s32.totalorder %s59, %s60
    %p72 = scmp.eq.s32.totalorder %s15, 3
    %p73 = por %p71, %p72
    %p75 = scmp.ne.s32.totalorder %s60, %s74
    %p76 = scmp.eq.s32.totalorder %s15, 0
    %p77 = por %p75, %p76
    %s79 = sadd.s32 %s78, 1
    %p82 = scmp.eq.s32.totalorder %s9, 3
    %p83 = scmp.ne.s32.totalorder %s78, %s80
    %p84 = scmp.eq.s32.totalorder %s9, 0
    %p85 = por %p83, %p84
    %p86 = scmp.ne.s32.totalorder %s78, %s80
    %p87 = scmp.eq.s32.totalorder %s14, 3
    %p88 = por %p86, %p87
    %p89 = scmp.ne.s32.totalorder %s80, %s81
    %p90 = scmp.eq.s32.totalorder %s14, 0
    %p91 = por %p89, %p90
    %p92 = scmp.ne.s32.totalorder %s80, %s81
    %p93 = scmp.eq.s32.totalorder %s15, 3
    %p94 = por %p92, %p93
    %p96 = scmp.ne.s32.totalorder %s81, %s95
    %p97 = scmp.eq.s32.totalorder %s15, 0
    %p98 = por %p96, %p97
    %s99 = ssub.s32 %s16, %s28
    %s100 = ssub.s32 %s17, %s24
    %s101 = sor.u32 %s99, %s100
    %p102 = scmp.eq.s32.totalorder %s101, 0
    %s104 = sadd.s32 %s103, 1
    %s105 = scalar_select %p102, %s103, %s104
    %p108 = pneg %p102
    %p109 = scmp.eq.s32.totalorder %s9, 3
    %p110 = por %p108, %p109
    %p111 = scmp.ne.s32.totalorder %s103, %s106
    %p112 = scmp.eq.s32.totalorder %s9, 0
    %p113 = por %p111, %p112
    %p114 = scmp.ne.s32.totalorder %s103, %s106
    %p115 = scmp.eq.s32.totalorder %s14, 3
    %p116 = por %p114, %p115
    %p117 = scmp.ne.s32.totalorder %s106, %s107
    %p118 = scmp.eq.s32.totalorder %s14, 0
    %p119 = por %p117, %p118
    %p120 = scmp.ne.s32.totalorder %s106, %s107
    %p121 = scmp.eq.s32.totalorder %s15, 3
    %p122 = por %p120, %p121
    %p124 = scmp.ne.s32.totalorder %s107, %s123
    %p125 = scmp.eq.s32.totalorder %s15, 0
    %p126 = por %p124, %p125
    %p127 = scmp.le.s32.totalorder 1, %s9
    %p128 = scmp.lt.s32.totalorder %s9, 5
    %p129 = pnand %p127, %p128
    %p130 = pneg %p129
    // Predicated region
    $region9: #{fp8_llama_forward.12} parent=5 // pred_check
      _
    $region10: #{fp8_llama_forward.12} parent=5 // pred_check_branch
      %132 = sbr.rel (%p129) target = $region12
    $region11: #{fp8_llama_forward.12} parent=5 // pred_region
      %s133 = ssub.s32 %s9, 1
      // Predicated region
      $region13: #{fp8_llama_forward.12} parent=11 // pred_check
        %p134 = pneg %p70
      $region14: #{fp8_llama_forward.12} parent=11 // pred_check_branch
        %136 = sbr.rel (%p134) target = $region16
      $region15: #{fp8_llama_forward.12} parent=11 // pred_region
        _
      $region16: #{fp8_llama_forward.12} parent=11 // pred_fallthru
        _
      // Predicated region
      $region17: #{fp8_llama_forward.12} parent=11 // pred_check
        %p137 = pneg %p91
      $region18: #{fp8_llama_forward.12} parent=11 // pred_check_branch
        %139 = sbr.rel (%p137) target = $region20
      $region19: #{fp8_llama_forward.12} parent=11 // pred_region
        _
      $region20: #{fp8_llama_forward.12} parent=11 // pred_fallthru
        _
    $region12: #{fp8_llama_forward.12} parent=5 // pred_fallthru
      _
    %p140 = scmp.lt.s32.totalorder %s9, 4
    // Predicated region
    $region21: #{fp8_llama_forward.12} parent=5 // pred_check
      %p141 = pneg %p140
    $region22: #{fp8_llama_forward.12} parent=5 // pred_check_branch
      %143 = sbr.rel (%p141) target = $region24
    $region23: #{fp8_llama_forward.12} parent=5 // pred_region
      // Predicated region
      $region25: #{fp8_llama_forward.12} parent=23 // pred_check
        %p144 = pneg %p43
      $region26: #{fp8_llama_forward.12} parent=23 // pred_check_branch
        %146 = sbr.rel (%p144) target = $region28
      $region27: #{fp8_llama_forward.12} parent=23 // pred_region
        %p147 = scmp.lt.s32.totalorder %s16, 1
        %s148 = scalar_select %p147, %s16, 1
        %p149 = scmp.lt.s32.totalorder %s17, 1
        %s150 = scalar_select %p149, %s17, 1
        %s151 = smul.addr %s148, 2
        %s152 = sadd.s32 %s150, %s151
        %s153 = smul.addr %s152, 4
        %s154 = scalar_lea.vmem %s0, %s153
      $region28: #{fp8_llama_forward.12} parent=23 // pred_fallthru
        _
    $region24: #{fp8_llama_forward.12} parent=5 // pred_fallthru
      _
    %p155 = scmp.le.s32.totalorder 1, %s9
    %p156 = scmp.lt.s32.totalorder %s9, 5
    %p157 = pnand %p155, %p156
    %p158 = pneg %p157
    // Predicated region
    $region29: #{fp8_llama_forward.12} parent=5 // pred_check
      _
    $region30: #{fp8_llama_forward.12} parent=5 // pred_check_branch
      %160 = sbr.rel (%p157) target = $region32
    $region31: #{fp8_llama_forward.12} parent=5 // pred_region
      %s161 = ssub.s32 %s9, 1
      %p162 = scmp.lt.s32.totalorder %s18, 1
      %s163 = scalar_select %p162, %s18, 1
      %p164 = scmp.lt.s32.totalorder %s19, 1
      %s165 = scalar_select %p164, %s19, 1
      %s166 = smul.addr %s163, 2
      %s167 = sadd.s32 %s165, %s166
      %s168 = smul.addr %s167, 4
      %s169 = scalar_lea.vmem %s0, %s168
      %p170 = pneg %p49
      %p171 = pneg %p46
      %p172 = pneg %p70
      %p173 = pneg %p67
      %p174 = pneg %p91
      %p175 = pneg %p88
      %p176 = pneg %p119
      %p177 = pneg %p116
      %p178 = scmp.lt.s32.totalorder %s18, 1
      %s179 = scalar_select %p178, %s18, 1
      %p180 = scmp.lt.s32.totalorder %s19, 1
      %s181 = scalar_select %p180, %s19, 1
      %s182 = smul.addr %s179, 2
      %s183 = sadd.s32 %s181, %s182
      %s184 = smul.addr %s183, 4
      %s185 = scalar_lea.vmem %s3, %s184
      %p186 = scmp.lt.s32.totalorder %s18, 1
      %s187 = scalar_select %p186, %s18, 1
      %p188 = scmp.lt.s32.totalorder %s19, 1
      %s189 = scalar_select %p188, %s19, 1
      %s190 = smul.addr %s187, 2
      %s191 = sadd.s32 %s189, %s190
      %s192 = smul.addr %s191, 4
      %s193 = scalar_lea.vmem %s0, %s192
      %p194 = scmp.lt.s32.totalorder %s18, 1
      %s195 = scalar_select %p194, %s18, 1
      %p196 = scmp.lt.s32.totalorder %s19, 1
      %s197 = scalar_select %p196, %s19, 1
      %s198 = smul.addr %s195, 2
      %s199 = sadd.s32 %s197, %s198
      %s200 = smul.addr %s199, 4
      %s201 = scalar_lea.vmem %s3, %s200
      %v203 = vld [vmem:[%s193] sm:$0xf]
      %v204 = vld [vmem:[%s1] sm:$0xff]
      %v205 = vld [vmem:[%s2] sm:$0xff]
      %v206 = vlaneseq
      %v207 = vshrl.u32 %v206, 7
      %v208 = vlaneseq
      %v209 = vand.u32 %v208, 127
      %vm210 = vcmp.le.s32.totalorder %v209, %v207
      %v211 = vunpack.c.l.bf16 %v203
      %213 = vrot.lane.b32.xlu0 %v211, 88
      %v214 = vpop.permute.xlu0 %213
      %216 = vrot.lane.b32.xlu0 %v211, 104
      %v217 = vpop.permute.xlu0 %216
      %vm219 = vcmask 64512
      %v220 = vsel %vm219, %v214, %v217
      %222 = vrot.lane.b32.xlu0 %v204, 32
      %v223 = vpop.permute.xlu0 %222
      %v225 = vmul.f32 %v211, %v223
      %v226 = vmul.f32 %v220, %v205
      %228 = vrot.lane.b32.xlu0 %v226, 32
      %v229 = vpop.permute.xlu0 %228
      %v231 = vadd.f32 %v225, %v229
      %v232 = vpack.c.bf16 %v231, %v231
      %233 = vrot.lane.b32.xlu0 %v211, 120
      %v234 = vpop.permute.xlu0 %233
      %236 = vrot.lane.b32.xlu0 %v211, 8
      %v237 = vpop.permute.xlu0 %236
      %v239 = vsel %vm219, %v234, %v237
      %v240 = vmul.f32 %v211, %v204
      %v241 = vmul.f32 %v239, %v205
      %v242 = vadd.f32 %v240, %v241
      %v243 = vmul.f32 %v242, 0.25
      %v244 = vpack.c.bf16 %v243, %v243
      %246 = vrot.lane.b32.xlu0 %v232, 96
      %v247 = vpop.permute.xlu0 %246
      %vm248 = vcmask 130048
      %v250 = vsel %vm248, %v244, 0
      %v253 = vsel %vm248, %v247, 0
      %255 = vmatpush.bf16.xpose.msra.mxu0 0
      %256 = vmatpush.bf16.xpose.msra.mxu0 0
      %257 = vmatpush.bf16.xpose.msra.mxu0 0
      %258 = vmatpush.bf16.xpose.msra.mxu0 0
      %259 = vmatpush.bf16.xpose.msra.mxu0 0
      %260 = vmatpush.bf16.xpose.msra.mxu0 0
      %261 = vmatpush.bf16.xpose.msra.mxu0 0
      %262 = vmatpush.bf16.xpose.msra.mxu0 %v253
      %263 = vmatmul.bf16.gmra.mxu0 %v250
      %v264 = vpop.f32.mrf.mxu0
      %v265 = vadd.f32 0.0, %v264
      %v266 = vpop.f32.mrf.mxu0
      %267 = vdwg.mxu0
      %v268 = vsel %vm210, %v265, -1e+30
      %v269 = vsel %vm219, %v268, -inf
      %270 = vmax.xlane.f32.xlu0 %v269
      %v271 = vpop.xlane.xlu0 %270
      %v272 = vsub.f32 %v268, %v271
      %v273 = vmul.f32 %v272, 1.442695
      %v274 = vpow.pop %v273
      %v275 = vsel %vm219, %v274, 0.0
      %276 = vadd.xlane.f32.xlu0 %v275
      %v277 = vpop.xlane.xlu0 %276
      %v278 = vpack.c.bf16 %v274, %v274
      %v280 = vunpack.c.l.b16 %v203
      %v281 = vpack.c.b16 %v280, %v280
      %282 = vrot.lane.b32.xlu0 %v281, 80
      %v283 = vpop.permute.xlu0 %282
      %v285 = vsel %vm219, %v278, 0
      %vm287 = vcmask 1043456
      %v289 = vsel %vm287, %v283, 0
      %291 = vmatpush.bf16.msra.mxu0 0
      %292 = vmatpush.bf16.msra.mxu0 0
      %293 = vmatpush.bf16.msra.mxu0 0
      %294 = vmatpush.bf16.msra.mxu0 0
      %295 = vmatpush.bf16.msra.mxu0 0
      %296 = vmatpush.bf16.msra.mxu0 0
      %297 = vmatpush.bf16.msra.mxu0 0
      %298 = vmatpush.bf16.msra.mxu0 %v289
      %299 = vmatmul.bf16.gmra.mxu0 %v285
      %v300 = vpop.f32.mrf.mxu0
      %v301 = vadd.f32 0.0, %v300
      %v302 = vpop.f32.mrf.mxu0
      %303 = vdwg.mxu0
      %v304 = vrcp.pop %v277
      %v305 = vmul.f32 %v301, %v304
      %v306 = vpack.c.bf16 %v305, %v305
      %vm307 = vcmask 125952
      %308 = vst.msk [vmem:[%s201] sm:$0xf] %vm307, %v306
      %v309 = vsel %vm219, %v217, %v234
      %310 = vrot.lane.b32.xlu0 %v204, 16
      %v311 = vpop.permute.xlu0 %310
      %v313 = vmul.f32 %v211, %v311
      %v314 = vmul.f32 %v309, %v205
      %316 = vrot.lane.b32.xlu0 %v314, 16
      %v317 = vpop.permute.xlu0 %316
      %v319 = vadd.f32 %v313, %v317
      %v320 = vmul.f32 %v319, 0.25
      %v321 = vpack.c.bf16 %v320, %v320
      %323 = vrot.lane.b32.xlu0 %v321, 112
      %v324 = vpop.permute.xlu0 %323
      %v326 = vsel %vm248, %v324, 0
      %328 = vmatpush.bf16.xpose.msra.mxu0 0
      %329 = vmatpush.bf16.xpose.msra.mxu0 0
      %330 = vmatpush.bf16.xpose.msra.mxu0 0
      %331 = vmatpush.bf16.xpose.msra.mxu0 0
      %332 = vmatpush.bf16.xpose.msra.mxu0 0
      %333 = vmatpush.bf16.xpose.msra.mxu0 0
      %334 = vmatpush.bf16.xpose.msra.mxu0 0
      %335 = vmatpush.bf16.xpose.msra.mxu0 %v253
      %336 = vmatmul.bf16.gmra.mxu0 %v326
      %v337 = vpop.f32.mrf.mxu0
      %v338 = vadd.f32 0.0, %v337
      %v339 = vpop.f32.mrf.mxu0
      %340 = vdwg.mxu0
      %v341 = vsel %vm210, %v338, -1e+30
      %v342 = vsel %vm219, %v341, -inf
      %343 = vmax.xlane.f32.xlu0 %v342
      %v344 = vpop.xlane.xlu0 %343
      %v345 = vsub.f32 %v341, %v344
      %v346 = vmul.f32 %v345, 1.442695
      %v347 = vpow.pop %v346
      %v348 = vsel %vm219, %v347, 0.0
      %349 = vadd.xlane.f32.xlu0 %v348
      %v350 = vpop.xlane.xlu0 %349
      %v351 = vpack.c.bf16 %v347, %v347
      %v353 = vsel %vm219, %v351, 0
      %355 = vmatpush.bf16.msra.mxu0 0
      %356 = vmatpush.bf16.msra.mxu0 0
      %357 = vmatpush.bf16.msra.mxu0 0
      %358 = vmatpush.bf16.msra.mxu0 0
      %359 = vmatpush.bf16.msra.mxu0 0
      %360 = vmatpush.bf16.msra.mxu0 0
      %361 = vmatpush.bf16.msra.mxu0 0
      %362 = vmatpush.bf16.msra.mxu0 %v289
      %363 = vmatmul.bf16.gmra.mxu0 %v353
      %v364 = vpop.f32.mrf.mxu0
      %v365 = vadd.f32 0.0, %v364
      %v366 = vpop.f32.mrf.mxu0
      %367 = vdwg.mxu0
      %v368 = vrcp.pop %v350
      %v369 = vmul.f32 %v365, %v368
      %v370 = vpack.c.bf16 %v369, %v369
      %372 = vrot.lane.b32.xlu0 %v370, 16
      %v373 = vpop.permute.xlu0 %372
      %vm375 = vcmask 257152
      %376 = vst.msk [vmem:[%s201] sm:$0xf] %vm375, %v373
      %p377 = scmp.lt.s32.totalorder %s18, 1
      %s378 = scalar_select %p377, %s18, 1
      %p379 = scmp.lt.s32.totalorder %s19, 1
      %s380 = scalar_select %p379, %s19, 1
      %s381 = smul.addr %s378, 2
      %s382 = sadd.s32 %s380, %s381
      %s383 = smul.addr %s382, 4
      %s384 = scalar_lea.vmem %s3, %s383
      // Predicated region
      $region33: #{fp8_llama_forward.12} parent=31 // pred_check
        %p385 = pneg %p116
      $region34: #{fp8_llama_forward.12} parent=31 // pred_check_branch
        %387 = sbr.rel (%p385) target = $region36
      $region35: #{fp8_llama_forward.12} parent=31 // pred_region
        _
      $region36: #{fp8_llama_forward.12} parent=31 // pred_fallthru
        _
    $region32: #{fp8_llama_forward.12} parent=5 // pred_fallthru
      _
    %p388 = scmp.le.s32.totalorder 2, %s9
    // Predicated region
    $region37: #{fp8_llama_forward.12} parent=5 // pred_check
      %p389 = pneg %p388
    $region38: #{fp8_llama_forward.12} parent=5 // pred_check_branch
      %391 = sbr.rel (%p389) target = $region40
    $region39: #{fp8_llama_forward.12} parent=5 // pred_region
      %s392 = ssub.s32 %s9, 2
      // Predicated region
      $region41: #{fp8_llama_forward.12} parent=39 // pred_check
        %p393 = pneg %p122
      $region42: #{fp8_llama_forward.12} parent=39 // pred_check_branch
        %395 = sbr.rel (%p393) target = $region44
      $region43: #{fp8_llama_forward.12} parent=39 // pred_region
        %p396 = scmp.lt.s32.totalorder %s20, 1
        %s397 = scalar_select %p396, %s20, 1
        %p398 = scmp.lt.s32.totalorder %s21, 1
        %s399 = scalar_select %p398, %s21, 1
        %s400 = smul.addr %s397, 2
        %s401 = sadd.s32 %s399, %s400
        %s402 = smul.addr %s401, 4
        %s403 = scalar_lea.vmem %s3, %s402
      $region44: #{fp8_llama_forward.12} parent=39 // pred_fallthru
        _
    $region40: #{fp8_llama_forward.12} parent=5 // pred_fallthru
      _
  $region6: #{fp8_llama_forward.12} parent=0 // loop_footer
    %s13 = sadd.s32 1, %s9
  $region7: #{fp8_llama_forward.12} parent=0 // loop_footer_branch
    %8 = sbr.rel target = $region3
  $region8: #{fp8_llama_forward.12} parent=0 // loop_exit
    _

// kernel: fp8_llama_forward.14
$region0: #{fp8_llama_forward.14}
  #allocation0 [shape = 'u32[]', space=smem, size = 0x4, offset = 0x4, fixed_abs, tag = 'smem constant byte address 0x4 - core index']
  #allocation1 [shape = 'u32[72,128]{1,0:T(1,128)}', space=vmem, size = 0x9000, scoped, tag = 'internal scratch']
  #allocation2 [shape = 'bf16[16,64]{1,0:T(8,128)(2,1)}', space=vmem, size = 0x1000, scoped, tag = 'scratch operand']
  %s0 = inlined_call_operand.vmem [shape: bf16[16,64], index: 0, kind: input, shape index: {}]
  %s1 = inlined_call_operand.vmem [shape: f32[1,64], index: 1, kind: input, shape index: {}]
  %s2 = inlined_call_operand.vmem [shape: bf16[64,128], index: 2, kind: input, shape index: {}]
  %s3 = inlined_call_operand.vmem [shape: bf16[64,128], index: 3, kind: input, shape index: {}]
  %s4 = inlined_call_operand.vmem [shape: bf16[16,128], index: 4, kind: output, shape index: {}]
  %s5 = sld [smem:[#allocation0]]
  $region30: #{fp8_llama_forward.14} parent=0
    _
  %s7 = ssub.s32 1, %s5
  %s8 = scalar_select 0, %s7, %s5
  // Predicated region
  $region2: #{fp8_llama_forward.14} parent=0 // pred_check
    _
  $region3: #{fp8_llama_forward.14} parent=0 // pred_check_branch
    %10 = sbr.rel (0) target = $region5
  $region4: #{fp8_llama_forward.14} parent=0 // pred_region
    _
  $region5: #{fp8_llama_forward.14} parent=0 // pred_fallthru
    _
  // Predicated region
  $region6: #{fp8_llama_forward.14} parent=0 // pred_check
    _
  $region7: #{fp8_llama_forward.14} parent=0 // pred_check_branch
    %12 = sbr.rel (0) target = $region9
  $region8: #{fp8_llama_forward.14} parent=0 // pred_region
    _
  $region9: #{fp8_llama_forward.14} parent=0 // pred_fallthru
    _
  // Predicated region
  $region10: #{fp8_llama_forward.14} parent=0 // pred_check
    _
  $region11: #{fp8_llama_forward.14} parent=0 // pred_check_branch
    %14 = sbr.rel (0) target = $region13
  $region12: #{fp8_llama_forward.14} parent=0 // pred_region
    _
  $region13: #{fp8_llama_forward.14} parent=0 // pred_fallthru
    _
  // Predicated region
  $region14: #{fp8_llama_forward.14} parent=0 // pred_check
    _
  $region15: #{fp8_llama_forward.14} parent=0 // pred_check_branch
    %16 = sbr.rel (0) target = $region17
  $region16: #{fp8_llama_forward.14} parent=0 // pred_region
    _
  $region17: #{fp8_llama_forward.14} parent=0 // pred_fallthru
    _
  %p18 = scmp.eq.s32.totalorder 0, 0
  // Predicated region
  $region18: #{fp8_llama_forward.14} parent=0 // pred_check
    %p19 = pneg %p18
  $region19: #{fp8_llama_forward.14} parent=0 // pred_check_branch
    %21 = sbr.rel (%p19) target = $region21
  $region20: #{fp8_llama_forward.14} parent=0 // pred_region
    %v22 = vld [vmem:[%s0] sm:$0xf]
    %v23 = vld [vmem:[%s0 + $0x4] sm:$0xf]
    %v24 = vunpack.c.l.bf16 %v22
    %v25 = vunpack.c.l.bf16 %v23
    %v26 = vmul.f32 %v24, %v24
    %v27 = vmul.f32 %v25, %v25
    %vm28 = vcmask 523264
    %v29 = vsel %vm28, %v26, 0.0
    %30 = vadd.xlane.f32.xlu0 %v29
    %v31 = vpop.xlane.xlu0 %30
    %v32 = vsel %vm28, %v27, 0.0
    %33 = vadd.xlane.f32.xlu0 %v32
    %v34 = vpop.xlane.xlu0 %33
    %v35 = vrcp.pop 64.0
    %v36 = vmul.f32 64.0, %v35
    %v37 = vsub.f32 1.0, %v36
    %v38 = vmul.f32 %v35, %v37
    %v39 = vadd.f32 %v35, %v38
    %vm40 = vweird.f32 %v35
    %v41 = vsel %vm40, %v35, %v39
    %v42 = vmul.f32 %v31, %v41
    %v43 = vmul.f32 %v34, %v41
    %v44 = vadd.f32 %v42, 1e-05
    %v45 = vadd.f32 %v43, 1e-05
    %v46 = vrsqrt.pop %v44
    %v47 = vmul.f32 %v46, %v44
    %v48 = vmul.f32 %v47, %v46
    %v49 = vmul.f32 0.5, %v48
    %v50 = vsub.f32 1.5, %v49
    %v51 = vmul.f32 %v46, %v50
    %vm52 = vweird.f32 %v44
    %vm53 = vweird.f32 %v46
    %vm54 = vmor %vm52, %vm53
    %v55 = vsel %vm54, %v46, %v51
    %v56 = vrsqrt.pop %v45
    %v57 = vmul.f32 %v56, %v45
    %v58 = vmul.f32 %v57, %v56
    %v59 = vmul.f32 0.5, %v58
    %v60 = vsub.f32 1.5, %v59
    %v61 = vmul.f32 %v56, %v60
    %vm62 = vweird.f32 %v45
    %vm63 = vweird.f32 %v56
    %vm64 = vmor %vm62, %vm63
    %v65 = vsel %vm64, %v56, %v61
    %v66 = vmul.f32 %v24, %v55
    %v67 = vmul.f32 %v25, %v65
    %v68 = vld [vmem:[%s1] sm:$0x1]
    %v70 = vperm.slane %v68, 0
    %v72 = vmul.f32 %v66, %v70
    %v73 = vmul.f32 %v67, %v70
    %v74 = vpack.c.bf16 %v72, %v72
    %v75 = vpack.c.bf16 %v73, %v73
    %vm76 = vcmask 519168
    %77 = vst.msk [vmem:[#allocation2] sm:$0xf] %vm76, %v74
    %78 = vst.msk [vmem:[#allocation2 + $0x4] sm:$0xf] %vm76, %v75
  $region21: #{fp8_llama_forward.14} parent=0 // pred_fallthru
    _
  %v79 = vld [vmem:[#allocation2] sm:$0xf]
  %v80 = vld [vmem:[#allocation2 + $0x4] sm:$0xf]
  %v81 = vld [vmem:[%s2] sm:$0xf]
  %v82 = vld [vmem:[%s2 + $0x4] sm:$0xf]
  %v83 = vld [vmem:[%s2 + $0x8] sm:$0xf]
  %v84 = vld [vmem:[%s2 + $0xc] sm:$0xf]
  %v85 = vld [vmem:[%s2 + $0x10] sm:$0xf]
  %v86 = vld [vmem:[%s2 + $0x14] sm:$0xf]
  %v87 = vld [vmem:[%s2 + $0x18] sm:$0xf]
  %v88 = vld [vmem:[%s2 + $0x1c] sm:$0xf]
  %v91 = vunpack.c.l.b16 %v79
  %v92 = vunpack.c.l.b16 %v80
  %v93 = vpack.c.b16 %v92, %v91
  %v102 = vunpack.c.l.b16 %v81
  %v103 = vunpack.c.l.b16 %v82
  %v104 = vunpack.c.l.b16 %v83
  %v105 = vunpack.c.l.b16 %v84
  %v106 = vunpack.c.l.b16 %v85
  %v107 = vunpack.c.l.b16 %v86
  %v108 = vunpack.c.l.b16 %v87
  %v109 = vunpack.c.l.b16 %v88
  %v110 = vpack.c.b16 %v103, %v102
  %v111 = vpack.c.b16 %v105, %v104
  %v112 = vpack.c.b16 %v107, %v106
  %v113 = vpack.c.b16 %v109, %v108
  %vm118 = vcmask 523264
  %v120 = vsel %vm118, %v93, 0
  %122 = vmatpush.bf16.msra.mxu0 0
  %123 = vmatpush.bf16.msra.mxu0 0
  %124 = vmatpush.bf16.msra.mxu0 0
  %125 = vmatpush.bf16.msra.mxu0 0
  %126 = vmatpush.bf16.msra.mxu0 %v113
  %127 = vmatpush.bf16.msra.mxu0 %v112
  %128 = vmatpush.bf16.msra.mxu0 %v111
  %129 = vmatpush.bf16.msra.mxu0 %v110
  %130 = vmatmul.bf16.gmra.mxu0 %v120
  %v131 = vpop.f32.mrf.mxu0
  %v132 = vadd.f32 0.0, %v131
  %v133 = vpop.f32.mrf.mxu0
  %v134 = vadd.f32 0.0, %v133
  %135 = vdwg.mxu0
  %v136 = vld [vmem:[%s3] sm:$0xf]
  %v137 = vld [vmem:[%s3 + $0x4] sm:$0xf]
  %v138 = vld [vmem:[%s3 + $0x8] sm:$0xf]
  %v139 = vld [vmem:[%s3 + $0xc] sm:$0xf]
  %v140 = vld [vmem:[%s3 + $0x10] sm:$0xf]
  %v141 = vld [vmem:[%s3 + $0x14] sm:$0xf]
  %v142 = vld [vmem:[%s3 + $0x18] sm:$0xf]
  %v143 = vld [vmem:[%s3 + $0x1c] sm:$0xf]
  %v152 = vunpack.c.l.b16 %v136
  %v153 = vunpack.c.l.b16 %v137
  %v154 = vunpack.c.l.b16 %v138
  %v155 = vunpack.c.l.b16 %v139
  %v156 = vunpack.c.l.b16 %v140
  %v157 = vunpack.c.l.b16 %v141
  %v158 = vunpack.c.l.b16 %v142
  %v159 = vunpack.c.l.b16 %v143
  %v160 = vpack.c.b16 %v153, %v152
  %v161 = vpack.c.b16 %v155, %v154
  %v162 = vpack.c.b16 %v157, %v156
  %v163 = vpack.c.b16 %v159, %v158
  %168 = vmatpush.bf16.msra.mxu0 0
  %169 = vmatpush.bf16.msra.mxu0 0
  %170 = vmatpush.bf16.msra.mxu0 0
  %171 = vmatpush.bf16.msra.mxu0 0
  %172 = vmatpush.bf16.msra.mxu0 %v163
  %173 = vmatpush.bf16.msra.mxu0 %v162
  %174 = vmatpush.bf16.msra.mxu0 %v161
  %175 = vmatpush.bf16.msra.mxu0 %v160
  %176 = vmatmul.bf16.gmra.mxu0 %v120
  %v177 = vpop.f32.mrf.mxu0
  %v178 = vadd.f32 0.0, %v177
  %v179 = vpop.f32.mrf.mxu0
  %v180 = vadd.f32 0.0, %v179
  %181 = vdwg.mxu0
  %v182 = vxor.u32 %v132, 2147483648
  %v183 = vxor.u32 %v134, 2147483648
  %v184 = vmul.f32 %v182, 1.442695
  %v185 = vpow.pop %v184
  %v186 = vmul.f32 %v183, 1.442695
  %v187 = vpow.pop %v186
  %v188 = vadd.f32 %v185, 1.0
  %v189 = vadd.f32 %v187, 1.0
  %v190 = vrcp.pop %v188
  %v191 = vmul.f32 %v188, %v190
  %v192 = vsub.f32 1.0, %v191
  %v193 = vmul.f32 %v190, %v192
  %v194 = vadd.f32 %v190, %v193
  %vm195 = vweird.f32 %v188
  %vm196 = vweird.f32 %v190
  %vm197 = vmor %vm195, %vm196
  %v198 = vsel %vm197, %v190, %v194
  %v199 = vand.u32 2147483647, %v188
  %vm200 = vcmp.eq.f32.partialorder %v199, 8.507059e+37
  %v201 = vand.u32 %v188, 2147483648
  %v202 = vor.u32 1.1754944e-38, %v201
  %v203 = vsel %vm200, %v202, %v198
  %v204 = vmul.f32 1.0, %v203
  %v205 = vrcp.pop %v189
  %v206 = vmul.f32 %v189, %v205
  %v207 = vsub.f32 1.0, %v206
  %v208 = vmul.f32 %v205, %v207
  %v209 = vadd.f32 %v205, %v208
  %vm210 = vweird.f32 %v189
  %vm211 = vweird.f32 %v205
  %vm212 = vmor %vm210, %vm211
  %v213 = vsel %vm212, %v205, %v209
  %v214 = vand.u32 2147483647, %v189
  %vm215 = vcmp.eq.f32.partialorder %v214, 8.507059e+37
  %v216 = vand.u32 %v189, 2147483648
  %v217 = vor.u32 1.1754944e-38, %v216
  %v218 = vsel %vm215, %v217, %v213
  %v219 = vmul.f32 1.0, %v218
  %v220 = vmul.f32 %v132, %v204
  %v221 = vmul.f32 %v134, %v219
  %v222 = vmul.f32 %v220, %v178
  %v223 = vmul.f32 %v221, %v180
  %v224 = vpack.c.bf16 %v222, %v222
  %v225 = vpack.c.bf16 %v223, %v223
  %226 = vst [vmem:[%s4] sm:$0xf] %v224
  %227 = vst [vmem:[%s4 + $0x4] sm:$0xf] %v225
  // Predicated region
  $region22: #{fp8_llama_forward.14} parent=0 // pred_check
    _
  $region23: #{fp8_llama_forward.14} parent=0 // pred_check_branch
    %229 = sbr.rel (0) target = $region25
  $region24: #{fp8_llama_forward.14} parent=0 // pred_region
    _
  $region25: #{fp8_llama_forward.14} parent=0 // pred_fallthru
    _
  // Predicated region
  $region26: #{fp8_llama_forward.14} parent=0 // pred_check
    _
  $region27: #{fp8_llama_forward.14} parent=0 // pred_check_branch
    %231 = sbr.rel (0) target = $region29
  $region28: #{fp8_llama_forward.14} parent=0 // pred_region
    _
  $region29: #{fp8_llama_forward.14} parent=0 // pred_fallthru
    _

// kernel: fp8_llama_forward.15
$region0: #{fp8_llama_forward.15}
  #allocation0 [shape = 'u32[]', space=smem, size = 0x4, offset = 0x4, fixed_abs, tag = 'smem constant byte address 0x4 - core index']
  #allocation1 [shape = 'u32[72,128]{1,0:T(1,128)}', space=vmem, size = 0x9000, scoped, tag = 'internal scratch']
  #allocation2 [shape = 'f32[16,64]{1,0:T(8,128)}', space=vmem, size = 0x2000, scoped, tag = 'scratch operand']
  %s0 = inlined_call_operand.vmem [shape: bf16[16,128], index: 0, kind: input, shape index: {}]
  %s1 = inlined_call_operand.vmem [shape: bf16[128,64], index: 1, kind: input, shape index: {}]
  %s2 = inlined_call_operand.vmem [shape: bf16[16,64], index: 2, kind: input, shape index: {}]
  %s3 = inlined_call_operand.vmem [shape: bf16[16,64], index: 3, kind: output, shape index: {}]
  %s4 = sld [smem:[#allocation0]]
  $region30: #{fp8_llama_forward.15} parent=0
    _
  %s6 = ssub.s32 1, %s4
  %s7 = scalar_select 0, %s6, %s4
  // Predicated region
  $region2: #{fp8_llama_forward.15} parent=0 // pred_check
    _
  $region3: #{fp8_llama_forward.15} parent=0 // pred_check_branch
    %9 = sbr.rel (0) target = $region5
  $region4: #{fp8_llama_forward.15} parent=0 // pred_region
    _
  $region5: #{fp8_llama_forward.15} parent=0 // pred_fallthru
    _
  // Predicated region
  $region6: #{fp8_llama_forward.15} parent=0 // pred_check
    _
  $region7: #{fp8_llama_forward.15} parent=0 // pred_check_branch
    %11 = sbr.rel (0) target = $region9
  $region8: #{fp8_llama_forward.15} parent=0 // pred_region
    _
  $region9: #{fp8_llama_forward.15} parent=0 // pred_fallthru
    _
  // Predicated region
  $region10: #{fp8_llama_forward.15} parent=0 // pred_check
    _
  $region11: #{fp8_llama_forward.15} parent=0 // pred_check_branch
    %13 = sbr.rel (0) target = $region13
  $region12: #{fp8_llama_forward.15} parent=0 // pred_region
    _
  $region13: #{fp8_llama_forward.15} parent=0 // pred_fallthru
    _
  %p14 = scmp.eq.s32.totalorder 0, 0
  // Predicated region
  $region14: #{fp8_llama_forward.15} parent=0 // pred_check
    %p15 = pneg %p14
  $region15: #{fp8_llama_forward.15} parent=0 // pred_check_branch
    %17 = sbr.rel (%p15) target = $region17
  $region16: #{fp8_llama_forward.15} parent=0 // pred_region
    %v18 = vld [vmem:[%s2] sm:$0xf]
    %v19 = vld [vmem:[%s2 + $0x4] sm:$0xf]
    %v20 = vunpack.c.l.bf16 %v18
    %v21 = vunpack.c.l.bf16 %v19
    %vm22 = vcmask 523264
    %23 = vst.msk [vmem:[#allocation2] sm:$0xff] %vm22, %v20
    %24 = vst.msk [vmem:[#allocation2 + $0x8] sm:$0xff] %vm22, %v21
  $region17: #{fp8_llama_forward.15} parent=0 // pred_fallthru
    _
  %v25 = vld [vmem:[#allocation2] sm:$0xff]
  %v26 = vld [vmem:[#allocation2 + $0x8] sm:$0xff]
  %v27 = vld [vmem:[%s0] sm:$0xf]
  %v28 = vld [vmem:[%s0 + $0x4] sm:$0xf]
  %v29 = vld [vmem:[%s1] sm:$0xf]
  %v30 = vld [vmem:[%s1 + $0x4] sm:$0xf]
  %v31 = vld [vmem:[%s1 + $0x8] sm:$0xf]
  %v32 = vld [vmem:[%s1 + $0xc] sm:$0xf]
  %v33 = vld [vmem:[%s1 + $0x10] sm:$0xf]
  %v34 = vld [vmem:[%s1 + $0x14] sm:$0xf]
  %v35 = vld [vmem:[%s1 + $0x18] sm:$0xf]
  %v36 = vld [vmem:[%s1 + $0x1c] sm:$0xf]
  %v37 = vld [vmem:[%s1 + $0x20] sm:$0xf]
  %v38 = vld [vmem:[%s1 + $0x24] sm:$0xf]
  %v39 = vld [vmem:[%s1 + $0x28] sm:$0xf]
  %v40 = vld [vmem:[%s1 + $0x2c] sm:$0xf]
  %v41 = vld [vmem:[%s1 + $0x30] sm:$0xf]
  %v42 = vld [vmem:[%s1 + $0x34] sm:$0xf]
  %v43 = vld [vmem:[%s1 + $0x38] sm:$0xf]
  %v44 = vld [vmem:[%s1 + $0x3c] sm:$0xf]
  %v47 = vunpack.c.l.b16 %v27
  %v48 = vunpack.c.l.b16 %v28
  %v49 = vpack.c.b16 %v48, %v47
  %v67 = vunpack.c.l.b16 %v29
  %v68 = vunpack.c.l.b16 %v30
  %v69 = vunpack.c.l.b16 %v31
  %v70 = vunpack.c.l.b16 %v32
  %v71 = vunpack.c.l.b16 %v33
  %v72 = vunpack.c.l.b16 %v34
  %v73 = vunpack.c.l.b16 %v35
  %v74 = vunpack.c.l.b16 %v36
  %v75 = vunpack.c.l.b16 %v37
  %v76 = vunpack.c.l.b16 %v38
  %v77 = vunpack.c.l.b16 %v39
  %v78 = vunpack.c.l.b16 %v40
  %v79 = vunpack.c.l.b16 %v41
  %v80 = vunpack.c.l.b16 %v42
  %v81 = vunpack.c.l.b16 %v43
  %v82 = vunpack.c.l.b16 %v44
  %v83 = vpack.c.b16 %v68, %v67
  %v84 = vpack.c.b16 %v70, %v69
  %v85 = vpack.c.b16 %v72, %v71
  %v86 = vpack.c.b16 %v74, %v73
  %v87 = vpack.c.b16 %v76, %v75
  %v88 = vpack.c.b16 %v78, %v77
  %v89 = vpack.c.b16 %v80, %v79
  %v90 = vpack.c.b16 %v82, %v81
  %99 = vmatpush.bf16.msra.mxu0 %v90
  %100 = vmatpush.bf16.msra.mxu0 %v89
  %101 = vmatpush.bf16.msra.mxu0 %v88
  %102 = vmatpush.bf16.msra.mxu0 %v87
  %103 = vmatpush.bf16.msra.mxu0 %v86
  %104 = vmatpush.bf16.msra.mxu0 %v85
  %105 = vmatpush.bf16.msra.mxu0 %v84
  %106 = vmatpush.bf16.msra.mxu0 %v83
  %107 = vmatmul.bf16.gmra.mxu0 %v49
  %v108 = vpop.f32.mrf.mxu0
  %v109 = vadd.f32 0.0, %v108
  %v110 = vpop.f32.mrf.mxu0
  %v111 = vadd.f32 0.0, %v110
  %112 = vdwg.mxu0
  %v113 = vadd.f32 %v25, %v109
  %v114 = vadd.f32 %v26, %v111
  %vm115 = vcmask 523264
  %116 = vst.msk [vmem:[#allocation2] sm:$0xff] %vm115, %v113
  %117 = vst.msk [vmem:[#allocation2 + $0x8] sm:$0xff] %vm115, %v114
  // Predicated region
  $region18: #{fp8_llama_forward.15} parent=0 // pred_check
    %p118 = pneg %p14
  $region19: #{fp8_llama_forward.15} parent=0 // pred_check_branch
    %120 = sbr.rel (%p118) target = $region21
  $region20: #{fp8_llama_forward.15} parent=0 // pred_region
    %v121 = vld [vmem:[#allocation2] sm:$0xff]
    %v122 = vld [vmem:[#allocation2 + $0x8] sm:$0xff]
    %v123 = vpack.c.bf16 %v121, %v121
    %v124 = vpack.c.bf16 %v122, %v122
    %vm125 = vcmask 519168
    %126 = vst.msk [vmem:[%s3] sm:$0xf] %vm125, %v123
    %127 = vst.msk [vmem:[%s3 + $0x4] sm:$0xf] %vm125, %v124
  $region21: #{fp8_llama_forward.15} parent=0 // pred_fallthru
    _
  // Predicated region
  $region22: #{fp8_llama_forward.15} parent=0 // pred_check
    _
  $region23: #{fp8_llama_forward.15} parent=0 // pred_check_branch
    %129 = sbr.rel (0) target = $region25
  $region24: #{fp8_llama_forward.15} parent=0 // pred_region
    _
  $region25: #{fp8_llama_forward.15} parent=0 // pred_fallthru
    _
  // Predicated region
  $region26: #{fp8_llama_forward.15} parent=0 // pred_check
    _
  $region27: #{fp8_llama_forward.15} parent=0 // pred_check_branch
    %131 = sbr.rel (0) target = $region29
  $region28: #{fp8_llama_forward.15} parent=0 // pred_region
    _
  $region29: #{fp8_llama_forward.15} parent=0 // pred_fallthru
    _

// kernel: fp8_llama_forward.21
$region0: #{fp8_llama_forward.21}
  #allocation0 [shape = 'u32[]', space=smem, size = 0x4, offset = 0x4, fixed_abs, tag = 'smem constant byte address 0x4 - core index']
  #allocation1 [shape = 'u32[72,128]{1,0:T(1,128)}', space=vmem, size = 0x9000, scoped, tag = 'internal scratch']
  #allocation2 [shape = 'bf16[16,64]{1,0:T(8,128)(2,1)}', space=vmem, size = 0x1000, scoped, tag = 'scratch operand']
  %s0 = inlined_call_operand.vmem [shape: bf16[16,64], index: 0, kind: input, shape index: {}]
  %s1 = inlined_call_operand.vmem [shape: f32[1,64], index: 1, kind: input, shape index: {}]
  %s2 = inlined_call_operand.vmem [shape: bf16[64,256], index: 2, kind: input, shape index: {}]
  %s3 = inlined_call_operand.hbm [shape: f32[16,256], index: 3, kind: output, shape index: {}]
  %s4 = sld [smem:[#allocation0]]
  $region26: #{fp8_llama_forward.21} parent=0
    _
  %s6 = ssub.s32 1, %s4
  %s7 = scalar_select 0, %s6, %s4
  $region1: #{fp8_llama_forward.21} parent=0
    #allocation3 [shape = 'u8[16384]{0}', space=vmem, size = 0x4000, scoped, tag = 'output window, operand 0, single buffered']
    #allocation4 [shape = 's32[1]{0}', space=sflag, size = 0x4, scoped, tag = 'scoped memory for fp8_llama_forward.21']
    %8 = vsyncpa [#allocation4], 0
    // Predicated region
    $region2: #{fp8_llama_forward.21} parent=1 // pred_check
      _
    $region3: #{fp8_llama_forward.21} parent=1 // pred_check_branch
      %10 = sbr.rel (0) target = $region5
    $region4: #{fp8_llama_forward.21} parent=1 // pred_region
      _
    $region5: #{fp8_llama_forward.21} parent=1 // pred_fallthru
      _
    // Predicated region
    $region6: #{fp8_llama_forward.21} parent=1 // pred_check
      _
    $region7: #{fp8_llama_forward.21} parent=1 // pred_check_branch
      %12 = sbr.rel (0) target = $region9
    $region8: #{fp8_llama_forward.21} parent=1 // pred_region
      _
    $region9: #{fp8_llama_forward.21} parent=1 // pred_fallthru
      _
    // Predicated region
    $region10: #{fp8_llama_forward.21} parent=1 // pred_check
      _
    $region11: #{fp8_llama_forward.21} parent=1 // pred_check_branch
      %14 = sbr.rel (0) target = $region13
    $region12: #{fp8_llama_forward.21} parent=1 // pred_region
      _
    $region13: #{fp8_llama_forward.21} parent=1 // pred_fallthru
      _
    %p16 = scmp.eq.s32.totalorder 0, 0
    // Predicated region
    $region14: #{fp8_llama_forward.21} parent=1 // pred_check
      %p17 = pneg %p16
    $region15: #{fp8_llama_forward.21} parent=1 // pred_check_branch
      %19 = sbr.rel (%p17) target = $region17
    $region16: #{fp8_llama_forward.21} parent=1 // pred_region
      %v20 = vld [vmem:[%s0] sm:$0xf]
      %v21 = vld [vmem:[%s0 + $0x4] sm:$0xf]
      %v22 = vunpack.c.l.bf16 %v20
      %v23 = vunpack.c.l.bf16 %v21
      %v24 = vmul.f32 %v22, %v22
      %v25 = vmul.f32 %v23, %v23
      %vm26 = vcmask 523264
      %v27 = vsel %vm26, %v24, 0.0
      %28 = vadd.xlane.f32.xlu0 %v27
      %v29 = vpop.xlane.xlu0 %28
      %v30 = vsel %vm26, %v25, 0.0
      %31 = vadd.xlane.f32.xlu0 %v30
      %v32 = vpop.xlane.xlu0 %31
      %v33 = vrcp.pop 64.0
      %v34 = vmul.f32 64.0, %v33
      %v35 = vsub.f32 1.0, %v34
      %v36 = vmul.f32 %v33, %v35
      %v37 = vadd.f32 %v33, %v36
      %vm38 = vweird.f32 %v33
      %v39 = vsel %vm38, %v33, %v37
      %v40 = vmul.f32 %v29, %v39
      %v41 = vmul.f32 %v32, %v39
      %v42 = vadd.f32 %v40, 1e-05
      %v43 = vadd.f32 %v41, 1e-05
      %v44 = vrsqrt.pop %v42
      %v45 = vmul.f32 %v44, %v42
      %v46 = vmul.f32 %v45, %v44
      %v47 = vmul.f32 0.5, %v46
      %v48 = vsub.f32 1.5, %v47
      %v49 = vmul.f32 %v44, %v48
      %vm50 = vweird.f32 %v42
      %vm51 = vweird.f32 %v44
      %vm52 = vmor %vm50, %vm51
      %v53 = vsel %vm52, %v44, %v49
      %v54 = vrsqrt.pop %v43
      %v55 = vmul.f32 %v54, %v43
      %v56 = vmul.f32 %v55, %v54
      %v57 = vmul.f32 0.5, %v56
      %v58 = vsub.f32 1.5, %v57
      %v59 = vmul.f32 %v54, %v58
      %vm60 = vweird.f32 %v43
      %vm61 = vweird.f32 %v54
      %vm62 = vmor %vm60, %vm61
      %v63 = vsel %vm62, %v54, %v59
      %v64 = vmul.f32 %v22, %v53
      %v65 = vmul.f32 %v23, %v63
      %v66 = vld [vmem:[%s1] sm:$0x1]
      %v68 = vperm.slane %v66, 0
      %v70 = vmul.f32 %v64, %v68
      %v71 = vmul.f32 %v65, %v68
      %v72 = vpack.c.bf16 %v70, %v70
      %v73 = vpack.c.bf16 %v71, %v71
      %vm74 = vcmask 519168
      %75 = vst.msk [vmem:[#allocation2] sm:$0xf] %vm74, %v72
      %76 = vst.msk [vmem:[#allocation2 + $0x4] sm:$0xf] %vm74, %v73
    $region17: #{fp8_llama_forward.21} parent=1 // pred_fallthru
      _
    %v77 = vld [vmem:[#allocation2] sm:$0xf]
    %v78 = vld [vmem:[#allocation2 + $0x4] sm:$0xf]
    %v79 = vld [vmem:[%s2] sm:$0xff]
    %v80 = vld [vmem:[%s2 + $0x8] sm:$0xff]
    %v81 = vld [vmem:[%s2 + $0x10] sm:$0xff]
    %v82 = vld [vmem:[%s2 + $0x18] sm:$0xff]
    %v83 = vld [vmem:[%s2 + $0x20] sm:$0xff]
    %v84 = vld [vmem:[%s2 + $0x28] sm:$0xff]
    %v85 = vld [vmem:[%s2 + $0x30] sm:$0xff]
    %v86 = vld [vmem:[%s2 + $0x38] sm:$0xff]
    %v89 = vunpack.c.l.b16 %v77
    %v90 = vunpack.c.l.b16 %v78
    %v91 = vpack.c.b16 %v90, %v89
    %v100 = vunpack.c.l.b16 %v79
    %v101 = vunpack.c.h.b16 %v79
    %v102 = vunpack.c.l.b16 %v80
    %v103 = vunpack.c.h.b16 %v80
    %v104 = vunpack.c.l.b16 %v81
    %v105 = vunpack.c.h.b16 %v81
    %v106 = vunpack.c.l.b16 %v82
    %v107 = vunpack.c.h.b16 %v82
    %v108 = vunpack.c.l.b16 %v83
    %v109 = vunpack.c.h.b16 %v83
    %v110 = vunpack.c.l.b16 %v84
    %v111 = vunpack.c.h.b16 %v84
    %v112 = vunpack.c.l.b16 %v85
    %v113 = vunpack.c.h.b16 %v85
    %v114 = vunpack.c.l.b16 %v86
    %v115 = vunpack.c.h.b16 %v86
    %v116 = vpack.c.b16 %v102, %v100
    %v117 = vpack.c.b16 %v103, %v101
    %v118 = vpack.c.b16 %v106, %v104
    %v119 = vpack.c.b16 %v107, %v105
    %v120 = vpack.c.b16 %v110, %v108
    %v121 = vpack.c.b16 %v111, %v109
    %v122 = vpack.c.b16 %v114, %v112
    %v123 = vpack.c.b16 %v115, %v113
    %vm132 = vcmask 523264
    %v134 = vsel %vm132, %v91, 0
    %136 = vmatpush.bf16.msra.mxu0 0
    %137 = vmatpush.bf16.msra.mxu0 0
    %138 = vmatpush.bf16.msra.mxu0 0
    %139 = vmatpush.bf16.msra.mxu0 0
    %140 = vmatpush.bf16.msra.mxu0 %v122
    %141 = vmatpush.bf16.msra.mxu0 %v120
    %142 = vmatpush.bf16.msra.mxu0 %v118
    %143 = vmatpush.bf16.msra.mxu0 %v116
    %144 = vmatmul.bf16.gmra.mxu0 %v134
    %v145 = vpop.f32.mrf.mxu0
    %v146 = vadd.f32 0.0, %v145
    %v147 = vpop.f32.mrf.mxu0
    %v148 = vadd.f32 0.0, %v147
    %149 = vdwg.mxu0
    %150 = vmatpush.bf16.msra.mxu0 0
    %151 = vmatpush.bf16.msra.mxu0 0
    %152 = vmatpush.bf16.msra.mxu0 0
    %153 = vmatpush.bf16.msra.mxu0 0
    %154 = vmatpush.bf16.msra.mxu0 %v123
    %155 = vmatpush.bf16.msra.mxu0 %v121
    %156 = vmatpush.bf16.msra.mxu0 %v119
    %157 = vmatpush.bf16.msra.mxu0 %v117
    %158 = vmatmul.bf16.gmra.mxu0 %v134
    %v159 = vpop.f32.mrf.mxu0
    %v160 = vadd.f32 0.0, %v159
    %v161 = vpop.f32.mrf.mxu0
    %v162 = vadd.f32 0.0, %v161
    %163 = vdwg.mxu0
    %164 = vst [vmem:[#allocation3] sm:$0xff] %v146
    %165 = vst [vmem:[#allocation3 + $0x8] sm:$0xff] %v160
    %166 = vst [vmem:[#allocation3 + $0x10] sm:$0xff] %v148
    %167 = vst [vmem:[#allocation3 + $0x18] sm:$0xff] %v162
    // Predicated region
    $region18: #{fp8_llama_forward.21} parent=1 // pred_check
      _
    $region19: #{fp8_llama_forward.21} parent=1 // pred_check_branch
      %169 = sbr.rel (0) target = $region21
    $region20: #{fp8_llama_forward.21} parent=1 // pred_region
      %171 = vsyncadd [#allocation4], 0
      %s172 = sshll.u32 [#allocation3], 4
      %s173 = int_to_ptr.vmem [resolvable:$true] %s172
      %s174 = sshll.u32 %s3, 4
      %s175 = int_to_ptr.hbm [resolvable:$true] %s174
      %180 = dma.vmem_to_hbm [thread:$0]  %s173, 512, %s175, [#allocation4], 256, 256, 16
    $region21: #{fp8_llama_forward.21} parent=1 // pred_fallthru
      _
    // Predicated region
    $region22: #{fp8_llama_forward.21} parent=1 // pred_check
      _
    $region23: #{fp8_llama_forward.21} parent=1 // pred_check_branch
      %182 = sbr.rel (0) target = $region25
    $region24: #{fp8_llama_forward.21} parent=1 // pred_region
      %184 = dma.done [#allocation4], 512
    $region25: #{fp8_llama_forward.21} parent=1 // pred_fallthru
      _
    %185 = vsyncpa [#allocation4], 1

</llo_original>
